<compile_context>
chip_gen: v7x
topology: tpu7x:2x2x1
jax: 0.10.0
libtpu: 0.0.40
codegen_flags: <defaults>
</compile_context>

<pallas_src>
import functools

import jax
import jax.numpy as jnp
import numpy as np
from jax.experimental import pallas as pl
from jax.experimental.pallas import tpu as pltpu


# ---------------------------------------------------------------------------
# In-kernel helpers (lower cleanly in Mosaic).
# ---------------------------------------------------------------------------
def _recip(x):
    """EUP approximate reciprocal + one Newton step (~full f32 accuracy)."""
    r = pl.reciprocal(x, approx=True)
    return r * (2.0 - x * r)


def _softmax_lastdim(x):
    m = jnp.max(x, axis=-1, keepdims=True)
    e = jnp.exp(x - m)
    return e * _recip(jnp.sum(e, axis=-1, keepdims=True))


def _sigmoid(x):
    # Numerically stable: never exponentiates a large positive argument.
    z = jnp.exp(-jnp.abs(x))
    pos = _recip(1.0 + z)
    return jnp.where(x >= 0, pos, 1.0 - pos)


# ---------------------------------------------------------------------------
# Pallas kernel: one grid step == TT recurrent time steps (time-chunked).
# Cell state persists in VMEM scratch across the sequential ("arbitrary")
# time-chunk grid axis; batch blocks are the outer ("parallel") axis.
# ---------------------------------------------------------------------------
def cmc_kernel(xma_ref, init_ref, wx_ref, wc_ref, bias_ref, wfc_ref, bfc_ref,
               out_ref, c_state, *, num_mass):
    TT = xma_ref.shape[0]
    BB, H = c_state.shape
    M = num_mass
    MH = M * H
    HH = H * H
    O = wfc_ref.shape[1]

    # New batch block => time-chunk index restarts at 0 => re-init the state.
    @pl.when(pl.program_id(1) == 0)
    def _():
        c_state[...] = jnp.broadcast_to(init_ref[...], (BB, H))

    @pl.loop(0, TT)
    def _(s):
        xma = xma_ref[s]                                   # (BB, M+A)
        xm = xma[:, :M]                                    # (BB, M)
        c = c_state[...]                                   # (BB, H)
        c_n = c * _recip(jnp.sum(c, axis=-1, keepdims=True) + 1e-5)

        # Two fused, lane-dense gate matmuls covering input gate,
        # redistribution matrix and output gate pre-activations.
        pre = (jnp.dot(xma, wx_ref[...], preferred_element_type=jnp.float32)
               + jnp.dot(c_n, wc_ref[...], preferred_element_type=jnp.float32)
               + bias_ref[...])                            # (BB, MH + HH + H)

        i_gate = _softmax_lastdim(pre[:, :MH].reshape(BB, M, H))
        r_gate = _softmax_lastdim(pre[:, MH:MH + HH].reshape(BB, H, H))
        o_gate = _sigmoid(pre[:, MH + HH:])                # (BB, H)

        # Mass-conserving update: contractions routed to the MXU.
        m_in = jnp.einsum("bqm,bmh->bqh", xm[:, None, :], i_gate,
                          preferred_element_type=jnp.float32)[:, 0, :]
        m_sys = jnp.einsum("bqh,bhk->bqk", c[:, None, :], r_gate,
                           preferred_element_type=jnp.float32)[:, 0, :]
        m_new = m_in + m_sys

        m_out = o_gate * m_new
        c_new = (1.0 - o_gate) * m_new
        c_state[...] = c_new

        # Final linear head (CMCModel.fc), applied per time step.
        logits = (jnp.dot(m_out, wfc_ref[...],
                          preferred_element_type=jnp.float32) + bfc_ref[...])

        # Packed output slab: [0:H) cell state, [H:H+O) logits, rest padding.
        out_ref[s, :, :H] = c_new
        out_ref[s, :, H:H + O] = logits


# ---------------------------------------------------------------------------
# Wrapper: parameter fusion / plumbing (pure-JAX glue) + pallas_call.
# ---------------------------------------------------------------------------
def cmc_forward(params, x_m, x_a, *, time_chunk=128):
    T, B, M = x_m.shape
    A = x_a.shape[-1]
    H = params["init_state"].shape[0]
    O = params["fc_b"].shape[0]
    G = M * H + H * H + H                                   # fused gate width

    # --- Fuse gate weights: one x-part, one c-part matrix and one bias row.
    # PyTorch layout is (out_features, in_features) with features [x_m,x_a,c_n].
    w_all = jnp.concatenate([params["w_i"], params["w_r"], params["w_o"]],
                            axis=0)                         # (G, M+A+H)
    wx = jnp.transpose(w_all[:, :M + A])                    # (M+A, G)
    wc = jnp.transpose(w_all[:, M + A:])                    # (H,   G)
    b_fused = jnp.concatenate(
        [params["b_i"], params["b_r"], params["b_o"]]).reshape(1, G)
    wfc = jnp.transpose(params["fc_w"])                     # (H, O)
    bfc = params["fc_b"].reshape(1, -1)                     # (1, O)
    init = params["init_state"].reshape(1, -1)              # (1, H)

    # --- Inputs: concat [x_m, x_a]; x_m is recovered in-kernel by slicing.
    x_ma = jnp.concatenate([x_m, x_a], axis=-1)             # (T, B, M+A)

    # --- Time chunking.
    TT = min(time_chunk, T)
    nt = pl.cdiv(T, TT)
    Tpad = nt * TT
    if Tpad != T:
        x_ma = jnp.concatenate(
            [x_ma, jnp.zeros((Tpad - T, B, M + A), x_ma.dtype)], axis=0)

    # --- Batch blocking: parallel axis for v7x's 2 TensorCores (only split when
    #     the halves stay sublane-aligned; at demo sizes BB == B).
    BB = B // 2 if (B % 16 == 0) else B
    nb = B // BB

    # --- Packed, lane-padded output slab: [.., :H] = c, [.., H:H+O] = logits.
    P = ((H + O + 127) // 128) * 128

    def const(shape):
        n = len(shape)
        return pl.BlockSpec(shape, lambda bi, ti, _n=n: (0,) * _n)

    grid_spec = pltpu.PrefetchScalarGridSpec(
        num_scalar_prefetch=0,
        grid=(nb, nt),
        in_specs=[
            pl.BlockSpec((TT, BB, M + A), lambda bi, ti: (ti, bi, 0)),  # x_ma
            const((1, H)),                                              # init
            const((M + A, G)), const((H, G)), const((1, G)),            # gates
            const((H, O)), const((1, O)),                               # fc
        ],
        out_specs=pl.BlockSpec((TT, BB, P), lambda bi, ti: (ti, bi, 0)),
        scratch_shapes=[pltpu.VMEM((BB, H), jnp.float32)],
    )

    flops = 2 * T * B * ((M + A) * G + H * G + M * H + H * H + H * O)
    transcendentals = T * B * (M * H + H * H + 2 * H + M + 2)
    bytes_accessed = 4 * (T * B * (M + A) + (M + A + H + 1) * G
                          + (H + 1) * O + H + T * B * P)

    out = pl.pallas_call(
        functools.partial(cmc_kernel, num_mass=M),
        out_shape=jax.ShapeDtypeStruct((Tpad, B, P), jnp.float32),
        grid_spec=grid_spec,
        compiler_params=pltpu.CompilerParams(
            dimension_semantics=("parallel", "arbitrary"),
            vmem_limit_bytes=48 * 1024 * 1024),
        cost_estimate=pl.CostEstimate(flops=flops,
                                      transcendentals=transcendentals,
                                      bytes_accessed=bytes_accessed),
    )(x_ma, init, wx, wc, b_fused, wfc, bfc)

    c_traj = out[:T, :, :H]
    logits = out[:T, :, H:H + O]
    return logits, c_traj


# ---------------------------------------------------------------------------
# Pure-JAX reference (same math, lax.scan) for a correctness check.
# ---------------------------------------------------------------------------
def cmc_reference(params, x_m, x_a):
    T, B, M = x_m.shape
    H = params["init_state"].shape[0]
    c0 = jnp.broadcast_to(params["init_state"][None, :], (B, H))

    def step(c, xs):
        xm_t, xa_t = xs
        c_n = c / (jnp.sum(c, axis=-1, keepdims=True) + 1e-5)
        feats = jnp.concatenate([xm_t, xa_t, c_n], axis=-1)
        i = jax.nn.softmax(
            (feats @ params["w_i"].T + params["b_i"]).reshape(B, M, H), axis=-1)
        r = jax.nn.softmax(
            (feats @ params["w_r"].T + params["b_r"]).reshape(B, H, H), axis=-1)
        o = jax.nn.sigmoid(feats @ params["w_o"].T + params["b_o"])
        m_in = jnp.einsum("bm,bmh->bh", xm_t, i)
        m_sys = jnp.einsum("bh,bhk->bk", c, r)
        m_new = m_in + m_sys
        m_out = o * m_new
        c_new = (1.0 - o) * m_new
        return c_new, (m_out, c_new)

    _, (m_out, c_traj) = jax.lax.scan(step, c0, (x_m, x_a))
    logits = m_out @ params["fc_w"].T + params["fc_b"]
    return logits, c_traj


# ---------------------------------------------------------------------------
# Deterministic parameter init (synthetic; mirrors the module's shapes).
# ---------------------------------------------------------------------------
def init_params(key, M, A, H, O, init_state_val=0.0):
    F = M + A + H
    ks = jax.random.split(key, 4)

    def u(k, shape, scale):
        return jax.random.uniform(k, shape, jnp.float32, -scale, scale)

    return dict(
        w_i=u(ks[0], (M * H, F), 1.0 / np.sqrt(F)),
        b_i=jnp.zeros((M * H,), jnp.float32),
        w_r=u(ks[1], (H * H, F), 1.0 / np.sqrt(F)),
        b_r=jnp.zeros((H * H,), jnp.float32),
        w_o=u(ks[2], (H, F), 1.0 / np.sqrt(F)),
        b_o=jnp.zeros((H,), jnp.float32),
        fc_w=u(ks[3], (O, H), np.sqrt(3.0) / np.sqrt(H)),  # kaiming_uniform (linear)
        fc_b=jnp.zeros((O,), jnp.float32),
        init_state=jnp.full((H,), init_state_val, jnp.float32),
    )


if __name__ == "__main__":
    T, B, M, A, H, O = 8, 2, 4, 3, 32, 2

    key = jax.random.PRNGKey(0)
    k_p, k_m, k_a = jax.random.split(key, 3)
    params = init_params(k_p, M, A, H, O, init_state_val=0.0)

    x_m = jax.random.uniform(k_m, (T, B, M), jnp.float32)       # mass inputs >= 0
    x_a = jax.random.normal(k_a, (T, B, A), jnp.float32)        # aux inputs

    logits, c = jax.block_until_ready(cmc_forward(params, x_m, x_a))

    ref_logits, ref_c = jax.block_until_ready(cmc_reference(params, x_m, x_a))
    np.testing.assert_allclose(np.asarray(logits), np.asarray(ref_logits),
                               rtol=2e-3, atol=2e-3)
    np.testing.assert_allclose(np.asarray(c), np.asarray(ref_c),
                               rtol=2e-3, atol=2e-3)

    assert logits.shape == (T, B, O) and c.shape == (T, B, H)
    print("KERNEL_OK")
</pallas_src>

<mosaic_0001>
module attributes {stable_mosaic.version = 11 : i64} {
  func.func @cmc_kernel(%arg0: i32, %arg1: i32, %arg2: memref<8x2x7xf32, #tpu.memory_space<vmem>>, %arg3: memref<1x32xf32, #tpu.memory_space<vmem>>, %arg4: memref<7x1184xf32, #tpu.memory_space<vmem>>, %arg5: memref<32x1184xf32, #tpu.memory_space<vmem>>, %arg6: memref<1x1184xf32, #tpu.memory_space<vmem>>, %arg7: memref<32x2xf32, #tpu.memory_space<vmem>>, %arg8: memref<1x2xf32, #tpu.memory_space<vmem>>, %arg9: memref<8x2x128xf32, #tpu.memory_space<vmem>>, %arg10: memref<2x32xf32, #tpu.memory_space<vmem>>) attributes {dimension_semantics = [#tpu.dimension_semantics<parallel>, #tpu.dimension_semantics<arbitrary>], iteration_bounds = array<i64: 1, 1>, scalar_prefetch = 0 : i64, scratch_operands = 1 : i64, tpu.core_type = #tpu.core_type<tc>, window_params = [{transform_indices = @transform_0, window_bounds = array<i64: 8, 2, 7>}, {pipeline_mode = #tpu.pipeline_mode<synchronous>, transform_indices = @transform_1, window_bounds = array<i64: 1, 32>}, {pipeline_mode = #tpu.pipeline_mode<synchronous>, transform_indices = @transform_2, window_bounds = array<i64: 7, 1184>}, {pipeline_mode = #tpu.pipeline_mode<synchronous>, transform_indices = @transform_3, window_bounds = array<i64: 32, 1184>}, {pipeline_mode = #tpu.pipeline_mode<synchronous>, transform_indices = @transform_4, window_bounds = array<i64: 1, 1184>}, {pipeline_mode = #tpu.pipeline_mode<synchronous>, transform_indices = @transform_5, window_bounds = array<i64: 32, 2>}, {pipeline_mode = #tpu.pipeline_mode<synchronous>, transform_indices = @transform_6, window_bounds = array<i64: 1, 2>}, {transform_indices = @transform_7, window_bounds = array<i64: 8, 2, 128>}]} {
    %c0_i32 = arith.constant 0 : i32
    %0 = arith.cmpi eq, %arg1, %c0_i32 : i32
    %1 = arith.extui %0 : i1 to i32
    %c0_i32_0 = arith.constant 0 : i32
    %2 = arith.cmpi ne, %1, %c0_i32_0 : i32
    scf.if %2 {
      %c0 = arith.constant 0 : index
      %c0_3 = arith.constant 0 : index
      %4 = vector.load %arg3[%c0, %c0_3] : memref<1x32xf32, #tpu.memory_space<vmem>>, vector<1x32xf32>
      %5 = vector.shape_cast %4 : vector<1x32xf32> to vector<1x32xf32>
      %6 = vector.broadcast %5 : vector<1x32xf32> to vector<2x32xf32>
      %c0_4 = arith.constant 0 : index
      %c0_5 = arith.constant 0 : index
      %7 = vector.load %arg10[%c0_4, %c0_5] : memref<2x32xf32, #tpu.memory_space<vmem>>, vector<2x32xf32>
      tpu.vector_store %arg10[%c0_4, %c0_5], %6 {strides = array<i32>} : memref<2x32xf32, #tpu.memory_space<vmem>>, vector<2x32xf32>,
    } else {
    }
    %c0_i32_1 = arith.constant 0 : i32
    %c8_i32 = arith.constant 8 : i32
    %3 = arith.addi %c0_i32_1, %c8_i32 : i32
    %c1_i32 = arith.constant 1 : i32
    scf.for %arg11 = %c0_i32_1 to %3 step %c1_i32  : i32 {
      %c1_i32_3 = arith.constant 1 : i32
      %4 = arith.muli %arg11, %c1_i32_3 : i32
      %c0_i32_4 = arith.constant 0 : i32
      %5 = arith.addi %c0_i32_4, %4 : i32
      %6 = arith.index_cast %5 : i32 to index
      %c0 = arith.constant 0 : index
      %c0_5 = arith.constant 0 : index
      %7 = vector.load %arg2[%6, %c0, %c0_5] : memref<8x2x7xf32, #tpu.memory_space<vmem>>, vector<1x2x7xf32>
      %8 = vector.shape_cast %7 : vector<1x2x7xf32> to vector<2x7xf32>
      %9 = vector.extract_strided_slice %8 {offsets = [0, 0], sizes = [2, 4], strides = [1, 1]} : vector<2x7xf32> to vector<2x4xf32>
      %c0_6 = arith.constant 0 : index
      %c0_7 = arith.constant 0 : index
      %10 = vector.load %arg10[%c0_6, %c0_7] : memref<2x32xf32, #tpu.memory_space<vmem>>, vector<2x32xf32>
      %cst = arith.constant dense<0.000000e+00> : vector<2xf32>
      %11 = vector.multi_reduction <add>, %10, %cst [1] : vector<2x32xf32> to vector<2xf32>
      %12 = vector.shape_cast %11 : vector<2xf32> to vector<2x1xf32>
      %cst_8 = arith.constant 9.99999974E-6 : f32
      %13 = vector.broadcast %cst_8 : f32 to vector<2x1xf32>
      %14 = arith.addf %12, %13 : vector<2x1xf32>
      %15 = tpu.reciprocal %14 {approx = true} : vector<2x1xf32> -> vector<2x1xf32>
      %16 = arith.mulf %14, %15 : vector<2x1xf32>
      %cst_9 = arith.constant 2.000000e+00 : f32
      %17 = vector.broadcast %cst_9 : f32 to vector<2x1xf32>
      %18 = arith.subf %17, %16 : vector<2x1xf32>
      %19 = arith.mulf %15, %18 : vector<2x1xf32>
      %20 = vector.broadcast %19 : vector<2x1xf32> to vector<2x32xf32>
      %21 = arith.mulf %10, %20 : vector<2x32xf32>
      %c0_10 = arith.constant 0 : index
      %c0_11 = arith.constant 0 : index
      %22 = vector.load %arg4[%c0_10, %c0_11] : memref<7x1184xf32, #tpu.memory_space<vmem>>, vector<7x1184xf32>
      %cst_12 = arith.constant dense<0.000000e+00> : vector<2x1184xf32>
      %23 = tpu.matmul %8, %22, %cst_12 {dimension_numbers = #tpu.dot_dimension_numbers<[1], [0], [0], [1], [0, 0, 1, 1], [], []>} : vector<2x7xf32>, vector<7x1184xf32>, vector<2x1184xf32> -> vector<2x1184xf32>
      %c0_13 = arith.constant 0 : index
      %c0_14 = arith.constant 0 : index
      %24 = vector.load %arg5[%c0_13, %c0_14] : memref<32x1184xf32, #tpu.memory_space<vmem>>, vector<32x1184xf32>
      %cst_15 = arith.constant dense<0.000000e+00> : vector<2x1184xf32>
      %25 = tpu.matmul %21, %24, %cst_15 {dimension_numbers = #tpu.dot_dimension_numbers<[1], [0], [0], [1], [0, 0, 1, 1], [], []>} : vector<2x32xf32>, vector<32x1184xf32>, vector<2x1184xf32> -> vector<2x1184xf32>
      %26 = arith.addf %23, %25 : vector<2x1184xf32>
      %c0_16 = arith.constant 0 : index
      %c0_17 = arith.constant 0 : index
      %27 = vector.load %arg6[%c0_16, %c0_17] : memref<1x1184xf32, #tpu.memory_space<vmem>>, vector<1x1184xf32>
      %28 = vector.broadcast %27 : vector<1x1184xf32> to vector<2x1184xf32>
      %29 = arith.addf %26, %28 : vector<2x1184xf32>
      %30 = vector.extract_strided_slice %29 {offsets = [0, 0], sizes = [2, 128], strides = [1, 1]} : vector<2x1184xf32> to vector<2x128xf32>
      %31 = vector.shape_cast %30 : vector<2x128xf32> to vector<2x4x32xf32>
      %cst_18 = arith.constant dense<0xFF800000> : vector<2x4xf32>
      %32 = vector.multi_reduction <maximumf>, %31, %cst_18 [2] : vector<2x4x32xf32> to vector<2x4xf32>
      %33 = vector.shape_cast %32 : vector<2x4xf32> to vector<2x4x1xf32>
      %34 = vector.broadcast %33 : vector<2x4x1xf32> to vector<2x4x32xf32>
      %35 = arith.subf %31, %34 : vector<2x4x32xf32>
      %36 = math.exp %35 : vector<2x4x32xf32>
      %cst_19 = arith.constant dense<0.000000e+00> : vector<2x4xf32>
      %37 = vector.multi_reduction <add>, %36, %cst_19 [2] : vector<2x4x32xf32> to vector<2x4xf32>
      %38 = vector.shape_cast %37 : vector<2x4xf32> to vector<2x4x1xf32>
      %39 = tpu.reciprocal %38 {approx = true} : vector<2x4x1xf32> -> vector<2x4x1xf32>
      %40 = arith.mulf %38, %39 : vector<2x4x1xf32>
      %cst_20 = arith.constant 2.000000e+00 : f32
      %41 = vector.broadcast %cst_20 : f32 to vector<2x4x1xf32>
      %42 = arith.subf %41, %40 : vector<2x4x1xf32>
      %43 = arith.mulf %39, %42 : vector<2x4x1xf32>
      %44 = vector.broadcast %43 : vector<2x4x1xf32> to vector<2x4x32xf32>
      %45 = arith.mulf %36, %44 : vector<2x4x32xf32>
      %46 = vector.extract_strided_slice %29 {offsets = [0, 128], sizes = [2, 1024], strides = [1, 1]} : vector<2x1184xf32> to vector<2x1024xf32>
      %47 = vector.shape_cast %46 : vector<2x1024xf32> to vector<2x32x32xf32>
      %cst_21 = arith.constant dense<0xFF800000> : vector<2x32xf32>
      %48 = vector.multi_reduction <maximumf>, %47, %cst_21 [2] : vector<2x32x32xf32> to vector<2x32xf32>
      %49 = vector.shape_cast %48 : vector<2x32xf32> to vector<2x32x1xf32>
      %50 = vector.broadcast %49 : vector<2x32x1xf32> to vector<2x32x32xf32>
      %51 = arith.subf %47, %50 : vector<2x32x32xf32>
      %52 = math.exp %51 : vector<2x32x32xf32>
      %cst_22 = arith.constant dense<0.000000e+00> : vector<2x32xf32>
      %53 = vector.multi_reduction <add>, %52, %cst_22 [2] : vector<2x32x32xf32> to vector<2x32xf32>
      %54 = vector.shape_cast %53 : vector<2x32xf32> to vector<2x32x1xf32>
      %55 = tpu.reciprocal %54 {approx = true} : vector<2x32x1xf32> -> vector<2x32x1xf32>
      %56 = arith.mulf %54, %55 : vector<2x32x1xf32>
      %cst_23 = arith.constant 2.000000e+00 : f32
      %57 = vector.broadcast %cst_23 : f32 to vector<2x32x1xf32>
      %58 = arith.subf %57, %56 : vector<2x32x1xf32>
      %59 = arith.mulf %55, %58 : vector<2x32x1xf32>
      %60 = vector.broadcast %59 : vector<2x32x1xf32> to vector<2x32x32xf32>
      %61 = arith.mulf %52, %60 : vector<2x32x32xf32>
      %62 = vector.extract_strided_slice %29 {offsets = [0, 1152], sizes = [2, 32], strides = [1, 1]} : vector<2x1184xf32> to vector<2x32xf32>
      %63 = math.absf %62 : vector<2x32xf32>
      %cst_24 = arith.constant 0.000000e+00 : f32
      %64 = vector.broadcast %cst_24 : f32 to vector<2x32xf32>
      %65 = arith.subf %64, %63 : vector<2x32xf32>
      %66 = math.exp %65 : vector<2x32xf32>
      %cst_25 = arith.constant 1.000000e+00 : f32
      %67 = vector.broadcast %cst_25 : f32 to vector<2x32xf32>
      %68 = arith.addf %67, %66 : vector<2x32xf32>
      %69 = tpu.reciprocal %68 {approx = true} : vector<2x32xf32> -> vector<2x32xf32>
      %70 = arith.mulf %68, %69 : vector<2x32xf32>
      %cst_26 = arith.constant 2.000000e+00 : f32
      %71 = vector.broadcast %cst_26 : f32 to vector<2x32xf32>
      %72 = arith.subf %71, %70 : vector<2x32xf32>
      %73 = arith.mulf %69, %72 : vector<2x32xf32>
      %cst_27 = arith.constant 0.000000e+00 : f32
      %74 = vector.broadcast %cst_27 : f32 to vector<2x32xf32>
      %75 = arith.cmpf oge, %62, %74 : vector<2x32xf32>
      %cst_28 = arith.constant 1.000000e+00 : f32
      %76 = vector.broadcast %cst_28 : f32 to vector<2x32xf32>
      %77 = arith.subf %76, %73 : vector<2x32xf32>
      %78 = arith.select %75, %73, %77 : vector<2x32xi1>, vector<2x32xf32>
      %79 = vector.shape_cast %9 : vector<2x4xf32> to vector<2x1x4xf32>
      "tpu.trace_start"() <{level = 10 : i32, message = "bqm,bmh->bqh"}> : () -> ()
      %cst_29 = arith.constant dense<0.000000e+00> : vector<2x1x32xf32>
      %80 = tpu.matmul %79, %45, %cst_29 {dimension_numbers = #tpu.dot_dimension_numbers<[2], [1], [1], [2], [0, 0, 0, 1, 1, 2], [0], [0]>} : vector<2x1x4xf32>, vector<2x4x32xf32>, vector<2x1x32xf32> -> vector<2x1x32xf32>
      "tpu.trace_stop"() : () -> ()
      %81 = vector.shape_cast %80 : vector<2x1x32xf32> to vector<2x32xf32>
      %82 = vector.shape_cast %10 : vector<2x32xf32> to vector<2x1x32xf32>
      "tpu.trace_start"() <{level = 10 : i32, message = "bqh,bhk->bqk"}> : () -> ()
      %cst_30 = arith.constant dense<0.000000e+00> : vector<2x1x32xf32>
      %83 = tpu.matmul %82, %61, %cst_30 {dimension_numbers = #tpu.dot_dimension_numbers<[2], [1], [1], [2], [0, 0, 0, 1, 1, 2], [0], [0]>} : vector<2x1x32xf32>, vector<2x32x32xf32>, vector<2x1x32xf32> -> vector<2x1x32xf32>
      "tpu.trace_stop"() : () -> ()
      %84 = vector.shape_cast %83 : vector<2x1x32xf32> to vector<2x32xf32>
      %85 = arith.addf %81, %84 : vector<2x32xf32>
      %86 = arith.mulf %78, %85 : vector<2x32xf32>
      %cst_31 = arith.constant 1.000000e+00 : f32
      %87 = vector.broadcast %cst_31 : f32 to vector<2x32xf32>
      %88 = arith.subf %87, %78 : vector<2x32xf32>
      %89 = arith.mulf %88, %85 : vector<2x32xf32>
      %c0_32 = arith.constant 0 : index
      %c0_33 = arith.constant 0 : index
      %90 = vector.load %arg10[%c0_32, %c0_33] : memref<2x32xf32, #tpu.memory_space<vmem>>, vector<2x32xf32>
      tpu.vector_store %arg10[%c0_32, %c0_33], %89 {strides = array<i32>} : memref<2x32xf32, #tpu.memory_space<vmem>>, vector<2x32xf32>,
      %c0_34 = arith.constant 0 : index
      %c0_35 = arith.constant 0 : index
      %91 = vector.load %arg7[%c0_34, %c0_35] : memref<32x2xf32, #tpu.memory_space<vmem>>, vector<32x2xf32>
      %cst_36 = arith.constant dense<0.000000e+00> : vector<2x2xf32>
      %92 = tpu.matmul %86, %91, %cst_36 {dimension_numbers = #tpu.dot_dimension_numbers<[1], [0], [0], [1], [0, 0, 1, 1], [], []>} : vector<2x32xf32>, vector<32x2xf32>, vector<2x2xf32> -> vector<2x2xf32>
      %c0_37 = arith.constant 0 : index
      %c0_38 = arith.constant 0 : index
      %93 = vector.load %arg8[%c0_37, %c0_38] : memref<1x2xf32, #tpu.memory_space<vmem>>, vector<1x2xf32>
      %94 = vector.broadcast %93 : vector<1x2xf32> to vector<2x2xf32>
      %95 = arith.addf %92, %94 : vector<2x2xf32>
      %96 = arith.index_cast %5 : i32 to index
      %c0_39 = arith.constant 0 : index
      %c0_40 = arith.constant 0 : index
      %97 = vector.load %arg9[%96, %c0_39, %c0_40] : memref<8x2x128xf32, #tpu.memory_space<vmem>>, vector<1x2x32xf32>
      %98 = vector.shape_cast %97 : vector<1x2x32xf32> to vector<2x32xf32>
      %99 = vector.shape_cast %89 : vector<2x32xf32> to vector<1x2x32xf32>
      tpu.vector_store %arg9[%96, %c0_39, %c0_40], %99 {strides = array<i32>} : memref<8x2x128xf32, #tpu.memory_space<vmem>>, vector<1x2x32xf32>,
      %100 = arith.index_cast %5 : i32 to index
      %c0_41 = arith.constant 0 : index
      %c32 = arith.constant 32 : index
      %101 = vector.load %arg9[%100, %c0_41, %c32] : memref<8x2x128xf32, #tpu.memory_space<vmem>>, vector<1x2x2xf32>
      %102 = vector.shape_cast %101 : vector<1x2x2xf32> to vector<2x2xf32>
      %103 = vector.shape_cast %95 : vector<2x2xf32> to vector<1x2x2xf32>
      tpu.vector_store %arg9[%100, %c0_41, %c32], %103 {strides = array<i32>} : memref<8x2x128xf32, #tpu.memory_space<vmem>>, vector<1x2x2xf32>,
    }
    %c8_i32_2 = arith.constant 8 : i32
    return
  }
  func.func @transform_0(%arg0: i32, %arg1: i32) -> (i32, i32, i32) {
    %c0_i32 = arith.constant 0 : i32
    %c0_i32_0 = arith.constant 0 : i32
    return %arg1, %arg0, %c0_i32 : i32, i32, i32
  }
  func.func @transform_1(%arg0: i32, %arg1: i32) -> (i32, i32) {
    %c0_i32 = arith.constant 0 : i32
    %c0_i32_0 = arith.constant 0 : i32
    %c0_i32_1 = arith.constant 0 : i32
    return %c0_i32, %c0_i32_0 : i32, i32
  }
  func.func @transform_2(%arg0: i32, %arg1: i32) -> (i32, i32) {
    %c0_i32 = arith.constant 0 : i32
    %c0_i32_0 = arith.constant 0 : i32
    %c0_i32_1 = arith.constant 0 : i32
    return %c0_i32, %c0_i32_0 : i32, i32
  }
  func.func @transform_3(%arg0: i32, %arg1: i32) -> (i32, i32) {
    %c0_i32 = arith.constant 0 : i32
    %c0_i32_0 = arith.constant 0 : i32
    %c0_i32_1 = arith.constant 0 : i32
    return %c0_i32, %c0_i32_0 : i32, i32
  }
  func.func @transform_4(%arg0: i32, %arg1: i32) -> (i32, i32) {
    %c0_i32 = arith.constant 0 : i32
    %c0_i32_0 = arith.constant 0 : i32
    %c0_i32_1 = arith.constant 0 : i32
    return %c0_i32, %c0_i32_0 : i32, i32
  }
  func.func @transform_5(%arg0: i32, %arg1: i32) -> (i32, i32) {
    %c0_i32 = arith.constant 0 : i32
    %c0_i32_0 = arith.constant 0 : i32
    %c0_i32_1 = arith.constant 0 : i32
    return %c0_i32, %c0_i32_0 : i32, i32
  }
  func.func @transform_6(%arg0: i32, %arg1: i32) -> (i32, i32) {
    %c0_i32 = arith.constant 0 : i32
    %c0_i32_0 = arith.constant 0 : i32
    %c0_i32_1 = arith.constant 0 : i32
    return %c0_i32, %c0_i32_0 : i32, i32
  }
  func.func @transform_7(%arg0: i32, %arg1: i32) -> (i32, i32, i32) {
    %c0_i32 = arith.constant 0 : i32
    %c0_i32_0 = arith.constant 0 : i32
    return %arg1, %arg0, %c0_i32 : i32, i32, i32
  }
}

</mosaic_0001>

<llo_original>
// kernel: tpu_custom_call.1
$region0: #{tpu_custom_call.1}
  #allocation0 [shape = 'u32[]', space=smem, size = 0x4, offset = 0x4, fixed_abs, tag = 'smem constant byte address 0x4 - core index']
  #allocation1 [shape = 'u32[144,128]{1,0:T(1,128)}', space=vmem, size = 0x12000, scoped, tag = 'internal scratch']
  #allocation2 [shape = 'f32[2,32]{1,0:T(2,128)}', space=vmem, size = 0x400, scoped, tag = 'scratch operand']
  %s0 = inlined_call_operand.vmem [shape: f32[8,2,7], index: 0, kind: input, shape index: {}]
  %s1 = inlined_call_operand.vmem [shape: f32[1,32], index: 1, kind: input, shape index: {}]
  %s2 = inlined_call_operand.hbm [shape: f32[7,1184], index: 2, kind: input, shape index: {}]
  %s3 = inlined_call_operand.hbm [shape: f32[32,1184], index: 3, kind: input, shape index: {}]
  %s4 = inlined_call_operand.vmem [shape: f32[1,1184], index: 4, kind: input, shape index: {}]
  %s5 = inlined_call_operand.vmem [shape: f32[32,2], index: 5, kind: input, shape index: {}]
  %s6 = inlined_call_operand.vmem [shape: f32[1,2], index: 6, kind: input, shape index: {}]
  %s7 = inlined_call_operand.hbm [shape: f32[8,2,128], index: 7, kind: output, shape index: {}]
  %s8 = sld [smem:[#allocation0]]
  $region57: #{tpu_custom_call.1} parent=0
    _
  %s10 = ssub.s32 1, %s8
  %s11 = scalar_select 0, %s10, %s8
  $region1: #{tpu_custom_call.1} parent=0
    #allocation3 [shape = 'u8[40960]{0}', space=vmem, size = 0xa000, scoped, tag = 'input window, operand 2, single buffered']
    #allocation4 [shape = 's32[1]{0}', space=sflag, size = 0x4, scoped, tag = 'scoped memory for tpu_custom_call.1']
    #allocation5 [shape = 's32[1]{0}', space=sflag, size = 0x4, scoped, tag = 'scoped memory for tpu_custom_call.1']
    #allocation6 [shape = 'u8[163840]{0}', space=vmem, size = 0x28000, scoped, tag = 'input window, operand 3, single buffered']
    #allocation7 [shape = 's32[1]{0}', space=sflag, size = 0x4, scoped, tag = 'scoped memory for tpu_custom_call.1']
    #allocation8 [shape = 'u8[8192]{0}', space=vmem, size = 0x2000, scoped, tag = 'output window, operand 0, single buffered']
    %12 = vsyncpa [#allocation4], 0
    %13 = vsyncpa [#allocation7], 0
    %14 = vsyncpa [#allocation5], 0
    // Predicated region
    $region2: #{tpu_custom_call.1} parent=1 // pred_check
      _
    $region3: #{tpu_custom_call.1} parent=1 // pred_check_branch
      %16 = sbr.rel (0) target = $region5
    $region4: #{tpu_custom_call.1} parent=1 // pred_region
      _
    $region5: #{tpu_custom_call.1} parent=1 // pred_fallthru
      _
    // Predicated region
    $region6: #{tpu_custom_call.1} parent=1 // pred_check
      _
    $region7: #{tpu_custom_call.1} parent=1 // pred_check_branch
      %18 = sbr.rel (0) target = $region9
    $region8: #{tpu_custom_call.1} parent=1 // pred_region
      _
    $region9: #{tpu_custom_call.1} parent=1 // pred_fallthru
      _
    // Predicated region
    $region10: #{tpu_custom_call.1} parent=1 // pred_check
      _
    $region11: #{tpu_custom_call.1} parent=1 // pred_check_branch
      %20 = sbr.rel (0) target = $region13
    $region12: #{tpu_custom_call.1} parent=1 // pred_region
      %s22 = ssub.s32 1280, 1280
      %23 = vsyncadd [#allocation4], %s22
      %s25 = sshll.u32 [#allocation3], 4
      %s26 = int_to_ptr.vmem [resolvable:$true] %s25
      %28 = dma.hbm_to_vmem [thread:$0]  %s2, 1280, %s26, [#allocation4]
    $region13: #{tpu_custom_call.1} parent=1 // pred_fallthru
      _
    // Predicated region
    $region14: #{tpu_custom_call.1} parent=1 // pred_check
      _
    $region15: #{tpu_custom_call.1} parent=1 // pred_check_branch
      %30 = sbr.rel (0) target = $region17
    $region16: #{tpu_custom_call.1} parent=1 // pred_region
      %s32 = ssub.s32 5120, 5120
      %33 = vsyncadd [#allocation7], %s32
      %s34 = sshll.u32 [#allocation6], 4
      %s35 = int_to_ptr.vmem [resolvable:$true] %s34
      %40 = dma.hbm_to_vmem [thread:$0]  %s3, 5120, %s35, [#allocation7], 1280, 1280, 80
    $region17: #{tpu_custom_call.1} parent=1 // pred_fallthru
      _
    // Predicated region
    $region18: #{tpu_custom_call.1} parent=1 // pred_check
      _
    $region19: #{tpu_custom_call.1} parent=1 // pred_check_branch
      %42 = sbr.rel (0) target = $region21
    $region20: #{tpu_custom_call.1} parent=1 // pred_region
      _
    $region21: #{tpu_custom_call.1} parent=1 // pred_fallthru
      _
    // Predicated region
    $region22: #{tpu_custom_call.1} parent=1 // pred_check
      _
    $region23: #{tpu_custom_call.1} parent=1 // pred_check_branch
      %44 = sbr.rel (0) target = $region25
    $region24: #{tpu_custom_call.1} parent=1 // pred_region
      _
    $region25: #{tpu_custom_call.1} parent=1 // pred_fallthru
      _
    // Predicated region
    $region26: #{tpu_custom_call.1} parent=1 // pred_check
      _
    $region27: #{tpu_custom_call.1} parent=1 // pred_check_branch
      %46 = sbr.rel (0) target = $region29
    $region28: #{tpu_custom_call.1} parent=1 // pred_region
      _
    $region29: #{tpu_custom_call.1} parent=1 // pred_fallthru
      _
    // Predicated region
    $region30: #{tpu_custom_call.1} parent=1 // pred_check
      _
    $region31: #{tpu_custom_call.1} parent=1 // pred_check_branch
      %48 = sbr.rel (0) target = $region33
    $region32: #{tpu_custom_call.1} parent=1 // pred_region
      %49 = dma.done [#allocation4], 1280
    $region33: #{tpu_custom_call.1} parent=1 // pred_fallthru
      _
    // Predicated region
    $region34: #{tpu_custom_call.1} parent=1 // pred_check
      _
    $region35: #{tpu_custom_call.1} parent=1 // pred_check_branch
      %51 = sbr.rel (0) target = $region37
    $region36: #{tpu_custom_call.1} parent=1 // pred_region
      %52 = dma.done [#allocation7], 5120
    $region37: #{tpu_custom_call.1} parent=1 // pred_fallthru
      _
    %p53 = scmp.eq.s32.totalorder 0, 0
    // Predicated region
    $region38: #{tpu_custom_call.1} parent=1 // pred_check
      %p54 = pneg %p53
    $region39: #{tpu_custom_call.1} parent=1 // pred_check_branch
      %56 = sbr.rel (%p54) target = $region41
    $region40: #{tpu_custom_call.1} parent=1 // pred_region
      %v57 = vld [vmem:[%s1] sm:$0x1]
      %v59 = vlaneseq
      %v60 = vshrl.u32 %v59, 7
      %v61 = vsub.s32 0, %v60
      %v62 = vrot.slane %v57, %v61
      %vm64 = vcmask 254976
      %65 = vst.msk [vmem:[#allocation2] sm:$0x3] %vm64, %v62
    $region41: #{tpu_custom_call.1} parent=1 // pred_fallthru
      _
    loop: start=0, step=1, limit=8
    $region42: #{tpu_custom_call.1} parent=1 // loop_pre_header
      _
    $region43: #{tpu_custom_call.1} parent=1 // loop_header
      %s67 = sphi 0, %s71
      %p68 = scmp.ge.s32.totalorder %s67, 8
    $region44: #{tpu_custom_call.1} parent=1 // loop_header_branch
      %70 = sbr.rel (%p68) target = $region48
    $region45: #{tpu_custom_call.1} parent=1 // loop_body
      %s72 = smul.u32 %s67, 2
      %s73 = scalar_lea.vmem %s0, %s72
      %v74 = vld [vmem:[%s73] sm:$0x3]
      %v75 = vld [vmem:[#allocation2] sm:$0x3]
      %vm76 = vcmask 254976
      %v77 = vsel %vm76, %v75, 0.0
      %78 = vadd.xlane.f32.xlu0 %v77
      %v79 = vpop.xlane.xlu0 %78
      %v80 = vadd.f32 %v79, 1e-05
      %v81 = vrcp.pop %v80
      %v82 = vmul.f32 %v80, %v81
      %v83 = vsub.f32 2.0, %v82
      %v84 = vmul.f32 %v81, %v83
      %v85 = vmul.f32 %v75, %v84
      %v86 = vld [vmem:[#allocation3] sm:$0x7f]
      %v87 = vld [vmem:[#allocation3 + $0x8] sm:$0x7f]
      %v88 = vld [vmem:[#allocation3 + $0x10] sm:$0x7f]
      %v89 = vld [vmem:[#allocation3 + $0x18] sm:$0x7f]
      %v90 = vld [vmem:[#allocation3 + $0x20] sm:$0x7f]
      %v91 = vld [vmem:[#allocation3 + $0x28] sm:$0x7f]
      %v92 = vld [vmem:[#allocation3 + $0x30] sm:$0x7f]
      %v93 = vld [vmem:[#allocation3 + $0x38] sm:$0x7f]
      %v94 = vld [vmem:[#allocation3 + $0x40] sm:$0x7f]
      %v95 = vld [vmem:[#allocation3 + $0x48] sm:$0x7f]
      %v96 = vld [vmem:[#allocation6] sm:$0xff]
      %v97 = vld [vmem:[#allocation6 + $0x8] sm:$0xff]
      %v98 = vld [vmem:[#allocation6 + $0x10] sm:$0xff]
      %v99 = vld [vmem:[#allocation6 + $0x18] sm:$0xff]
      %v100 = vld [vmem:[#allocation6 + $0x20] sm:$0xff]
      %v101 = vld [vmem:[#allocation6 + $0x28] sm:$0xff]
      %v102 = vld [vmem:[#allocation6 + $0x30] sm:$0xff]
      %v103 = vld [vmem:[#allocation6 + $0x38] sm:$0xff]
      %v104 = vld [vmem:[#allocation6 + $0x40] sm:$0xff]
      %v105 = vld [vmem:[#allocation6 + $0x48] sm:$0xff]
      %v106 = vld [vmem:[#allocation6 + $0x50] sm:$0xff]
      %v107 = vld [vmem:[#allocation6 + $0x58] sm:$0xff]
      %v108 = vld [vmem:[#allocation6 + $0x60] sm:$0xff]
      %v109 = vld [vmem:[#allocation6 + $0x68] sm:$0xff]
      %v110 = vld [vmem:[#allocation6 + $0x70] sm:$0xff]
      %v111 = vld [vmem:[#allocation6 + $0x78] sm:$0xff]
      %v112 = vld [vmem:[#allocation6 + $0x80] sm:$0xff]
      %v113 = vld [vmem:[#allocation6 + $0x88] sm:$0xff]
      %v114 = vld [vmem:[#allocation6 + $0x90] sm:$0xff]
      %v115 = vld [vmem:[#allocation6 + $0x98] sm:$0xff]
      %v116 = vld [vmem:[#allocation6 + $0xa0] sm:$0xff]
      %v117 = vld [vmem:[#allocation6 + $0xa8] sm:$0xff]
      %v118 = vld [vmem:[#allocation6 + $0xb0] sm:$0xff]
      %v119 = vld [vmem:[#allocation6 + $0xb8] sm:$0xff]
      %v120 = vld [vmem:[#allocation6 + $0xc0] sm:$0xff]
      %v121 = vld [vmem:[#allocation6 + $0xc8] sm:$0xff]
      %v122 = vld [vmem:[#allocation6 + $0xd0] sm:$0xff]
      %v123 = vld [vmem:[#allocation6 + $0xd8] sm:$0xff]
      %v124 = vld [vmem:[#allocation6 + $0xe0] sm:$0xff]
      %v125 = vld [vmem:[#allocation6 + $0xe8] sm:$0xff]
      %v126 = vld [vmem:[#allocation6 + $0xf0] sm:$0xff]
      %v127 = vld [vmem:[#allocation6 + $0xf8] sm:$0xff]
      %v128 = vld [vmem:[#allocation6 + $0x100] sm:$0xff]
      %v129 = vld [vmem:[#allocation6 + $0x108] sm:$0xff]
      %v130 = vld [vmem:[#allocation6 + $0x110] sm:$0xff]
      %v131 = vld [vmem:[#allocation6 + $0x118] sm:$0xff]
      %v132 = vld [vmem:[#allocation6 + $0x120] sm:$0xff]
      %v133 = vld [vmem:[#allocation6 + $0x128] sm:$0xff]
      %v134 = vld [vmem:[#allocation6 + $0x130] sm:$0xff]
      %v135 = vld [vmem:[#allocation6 + $0x138] sm:$0xff]
      %vm136 = vcmask 261120
      %v138 = vsel %vm136, %v85, 0
      %140 = vmatprep.subr.mxu0 %v97
      %141 = vmatpush1.msra.mxu0 %v96
      %142 = vmatprep.subr.mxu0 %v107
      %143 = vmatpush1.msra.mxu0 %v106
      %144 = vmatprep.subr.mxu0 %v117
      %145 = vmatpush1.msra.mxu0 %v116
      %146 = vmatprep.subr.mxu0 %v127
      %147 = vmatpush1.msra.mxu0 %v126
      %148 = vmatprep.subr.mxu0 0.0
      %149 = vmatpush1.msra.mxu0 0.0
      %150 = vmatprep.subr.mxu0 0.0
      %151 = vmatpush1.msra.mxu0 0.0
      %152 = vmatprep.subr.mxu0 0.0
      %153 = vmatpush1.msra.mxu0 0.0
      %154 = vmatprep.subr.mxu0 0.0
      %155 = vmatpush1.msra.mxu0 0.0
      %156 = vmatprep.subr.mxu0 0.0
      %157 = vmatpush1.msra.mxu0 0.0
      %158 = vmatprep.subr.mxu0 0.0
      %159 = vmatpush1.msra.mxu0 0.0
      %160 = vmatprep.subr.mxu0 0.0
      %161 = vmatpush1.msra.mxu0 0.0
      %162 = vmatprep.subr.mxu0 0.0
      %163 = vmatpush1.msra.mxu0 0.0
      %164 = vmatprep.subr.mxu0 0.0
      %165 = vmatpush1.msra.mxu0 0.0
      %166 = vmatprep.subr.mxu0 0.0
      %167 = vmatpush1.msra.mxu0 0.0
      %168 = vmatprep.subr.mxu0 0.0
      %169 = vmatpush1.msra.mxu0 0.0
      %170 = vmatprep.subr.mxu0 0.0
      %171 = vmatpush1.msra.mxu0 0.0
      %172 = vmatprep.subr.mxu0 0.0
      %173 = vmatpush1.msra.mxu0 0.0
      %174 = vmatprep.subr.mxu0 0.0
      %175 = vmatpush1.msra.mxu0 0.0
      %176 = vmatprep.subr.mxu0 0.0
      %177 = vmatpush1.msra.mxu0 0.0
      %178 = vmatprep.subr.mxu0 0.0
      %179 = vmatpush1.msra.mxu0 0.0
      %180 = vmatprep.subr.mxu0 0.0
      %181 = vmatpush1.msra.mxu0 0.0
      %182 = vmatprep.subr.mxu0 0.0
      %183 = vmatpush1.msra.mxu0 0.0
      %184 = vmatprep.subr.mxu0 0.0
      %185 = vmatpush1.msra.mxu0 0.0
      %186 = vmatprep.subr.mxu0 0.0
      %187 = vmatpush1.msra.mxu0 0.0
      %188 = vmatprep.subr.mxu0 0.0
      %189 = vmatpush1.msra.mxu0 0.0
      %190 = vmatprep.subr.mxu0 0.0
      %191 = vmatpush1.msra.mxu0 0.0
      %192 = vmatprep.subr.mxu0 0.0
      %193 = vmatpush1.msra.mxu0 0.0
      %194 = vmatprep.subr.mxu0 0.0
      %195 = vmatpush1.msra.mxu0 0.0
      %196 = vmatprep.subr.mxu0 0.0
      %197 = vmatpush1.msra.mxu0 0.0
      %198 = vmatprep.subr.mxu0 0.0
      %199 = vmatpush1.msra.mxu0 0.0
      %200 = vmatprep.subr.mxu0 0.0
      %201 = vmatpush1.msra.mxu0 0.0
      %202 = vmatprep.subr.mxu0 0.0
      %203 = vmatpush1.msra.mxu0 0.0
      %204 = vmatprep.mubr.f32.mxu0 0.0
      %205 = vmatmul.mubr.f32.gmra.mrb[0].mxu0 %v138
      %v206 = vpop.f32.mrb[0].mxu0
      %v207 = vadd.f32 0.0, %v206
      %v208 = vpop.f32.mrb[0].mxu0
      %v209 = vadd.f32 0.0, %v208
      %210 = vdwg.mxu0
      %211 = vmatprep.subr.mxu0 %v99
      %212 = vmatpush1.msra.mxu0 %v98
      %213 = vmatprep.subr.mxu0 %v109
      %214 = vmatpush1.msra.mxu0 %v108
      %215 = vmatprep.subr.mxu0 %v119
      %216 = vmatpush1.msra.mxu0 %v118
      %217 = vmatprep.subr.mxu0 %v129
      %218 = vmatpush1.msra.mxu0 %v128
      %219 = vmatprep.subr.mxu0 0.0
      %220 = vmatpush1.msra.mxu0 0.0
      %221 = vmatprep.subr.mxu0 0.0
      %222 = vmatpush1.msra.mxu0 0.0
      %223 = vmatprep.subr.mxu0 0.0
      %224 = vmatpush1.msra.mxu0 0.0
      %225 = vmatprep.subr.mxu0 0.0
      %226 = vmatpush1.msra.mxu0 0.0
      %227 = vmatprep.subr.mxu0 0.0
      %228 = vmatpush1.msra.mxu0 0.0
      %229 = vmatprep.subr.mxu0 0.0
      %230 = vmatpush1.msra.mxu0 0.0
      %231 = vmatprep.subr.mxu0 0.0
      %232 = vmatpush1.msra.mxu0 0.0
      %233 = vmatprep.subr.mxu0 0.0
      %234 = vmatpush1.msra.mxu0 0.0
      %235 = vmatprep.subr.mxu0 0.0
      %236 = vmatpush1.msra.mxu0 0.0
      %237 = vmatprep.subr.mxu0 0.0
      %238 = vmatpush1.msra.mxu0 0.0
      %239 = vmatprep.subr.mxu0 0.0
      %240 = vmatpush1.msra.mxu0 0.0
      %241 = vmatprep.subr.mxu0 0.0
      %242 = vmatpush1.msra.mxu0 0.0
      %243 = vmatprep.subr.mxu0 0.0
      %244 = vmatpush1.msra.mxu0 0.0
      %245 = vmatprep.subr.mxu0 0.0
      %246 = vmatpush1.msra.mxu0 0.0
      %247 = vmatprep.subr.mxu0 0.0
      %248 = vmatpush1.msra.mxu0 0.0
      %249 = vmatprep.subr.mxu0 0.0
      %250 = vmatpush1.msra.mxu0 0.0
      %251 = vmatprep.subr.mxu0 0.0
      %252 = vmatpush1.msra.mxu0 0.0
      %253 = vmatprep.subr.mxu0 0.0
      %254 = vmatpush1.msra.mxu0 0.0
      %255 = vmatprep.subr.mxu0 0.0
      %256 = vmatpush1.msra.mxu0 0.0
      %257 = vmatprep.subr.mxu0 0.0
      %258 = vmatpush1.msra.mxu0 0.0
      %259 = vmatprep.subr.mxu0 0.0
      %260 = vmatpush1.msra.mxu0 0.0
      %261 = vmatprep.subr.mxu0 0.0
      %262 = vmatpush1.msra.mxu0 0.0
      %263 = vmatprep.subr.mxu0 0.0
      %264 = vmatpush1.msra.mxu0 0.0
      %265 = vmatprep.subr.mxu0 0.0
      %266 = vmatpush1.msra.mxu0 0.0
      %267 = vmatprep.subr.mxu0 0.0
      %268 = vmatpush1.msra.mxu0 0.0
      %269 = vmatprep.subr.mxu0 0.0
      %270 = vmatpush1.msra.mxu0 0.0
      %271 = vmatprep.subr.mxu0 0.0
      %272 = vmatpush1.msra.mxu0 0.0
      %273 = vmatprep.subr.mxu0 0.0
      %274 = vmatpush1.msra.mxu0 0.0
      %275 = vmatprep.mubr.f32.mxu0 0.0
      %276 = vmatmul.mubr.f32.gmra.mrb[0].mxu0 %v138
      %v277 = vpop.f32.mrb[0].mxu0
      %v278 = vadd.f32 0.0, %v277
      %v279 = vpop.f32.mrb[0].mxu0
      %v280 = vadd.f32 0.0, %v279
      %281 = vdwg.mxu0
      %282 = vmatprep.subr.mxu0 %v101
      %283 = vmatpush1.msra.mxu0 %v100
      %284 = vmatprep.subr.mxu0 %v111
      %285 = vmatpush1.msra.mxu0 %v110
      %286 = vmatprep.subr.mxu0 %v121
      %287 = vmatpush1.msra.mxu0 %v120
      %288 = vmatprep.subr.mxu0 %v131
      %289 = vmatpush1.msra.mxu0 %v130
      %290 = vmatprep.subr.mxu0 0.0
      %291 = vmatpush1.msra.mxu0 0.0
      %292 = vmatprep.subr.mxu0 0.0
      %293 = vmatpush1.msra.mxu0 0.0
      %294 = vmatprep.subr.mxu0 0.0
      %295 = vmatpush1.msra.mxu0 0.0
      %296 = vmatprep.subr.mxu0 0.0
      %297 = vmatpush1.msra.mxu0 0.0
      %298 = vmatprep.subr.mxu0 0.0
      %299 = vmatpush1.msra.mxu0 0.0
      %300 = vmatprep.subr.mxu0 0.0
      %301 = vmatpush1.msra.mxu0 0.0
      %302 = vmatprep.subr.mxu0 0.0
      %303 = vmatpush1.msra.mxu0 0.0
      %304 = vmatprep.subr.mxu0 0.0
      %305 = vmatpush1.msra.mxu0 0.0
      %306 = vmatprep.subr.mxu0 0.0
      %307 = vmatpush1.msra.mxu0 0.0
      %308 = vmatprep.subr.mxu0 0.0
      %309 = vmatpush1.msra.mxu0 0.0
      %310 = vmatprep.subr.mxu0 0.0
      %311 = vmatpush1.msra.mxu0 0.0
      %312 = vmatprep.subr.mxu0 0.0
      %313 = vmatpush1.msra.mxu0 0.0
      %314 = vmatprep.subr.mxu0 0.0
      %315 = vmatpush1.msra.mxu0 0.0
      %316 = vmatprep.subr.mxu0 0.0
      %317 = vmatpush1.msra.mxu0 0.0
      %318 = vmatprep.subr.mxu0 0.0
      %319 = vmatpush1.msra.mxu0 0.0
      %320 = vmatprep.subr.mxu0 0.0
      %321 = vmatpush1.msra.mxu0 0.0
      %322 = vmatprep.subr.mxu0 0.0
      %323 = vmatpush1.msra.mxu0 0.0
      %324 = vmatprep.subr.mxu0 0.0
      %325 = vmatpush1.msra.mxu0 0.0
      %326 = vmatprep.subr.mxu0 0.0
      %327 = vmatpush1.msra.mxu0 0.0
      %328 = vmatprep.subr.mxu0 0.0
      %329 = vmatpush1.msra.mxu0 0.0
      %330 = vmatprep.subr.mxu0 0.0
      %331 = vmatpush1.msra.mxu0 0.0
      %332 = vmatprep.subr.mxu0 0.0
      %333 = vmatpush1.msra.mxu0 0.0
      %334 = vmatprep.subr.mxu0 0.0
      %335 = vmatpush1.msra.mxu0 0.0
      %336 = vmatprep.subr.mxu0 0.0
      %337 = vmatpush1.msra.mxu0 0.0
      %338 = vmatprep.subr.mxu0 0.0
      %339 = vmatpush1.msra.mxu0 0.0
      %340 = vmatprep.subr.mxu0 0.0
      %341 = vmatpush1.msra.mxu0 0.0
      %342 = vmatprep.subr.mxu0 0.0
      %343 = vmatpush1.msra.mxu0 0.0
      %344 = vmatprep.subr.mxu0 0.0
      %345 = vmatpush1.msra.mxu0 0.0
      %346 = vmatprep.mubr.f32.mxu0 0.0
      %347 = vmatmul.mubr.f32.gmra.mrb[0].mxu0 %v138
      %v348 = vpop.f32.mrb[0].mxu0
      %v349 = vadd.f32 0.0, %v348
      %v350 = vpop.f32.mrb[0].mxu0
      %v351 = vadd.f32 0.0, %v350
      %352 = vdwg.mxu0
      %353 = vmatprep.subr.mxu0 %v103
      %354 = vmatpush1.msra.mxu0 %v102
      %355 = vmatprep.subr.mxu0 %v113
      %356 = vmatpush1.msra.mxu0 %v112
      %357 = vmatprep.subr.mxu0 %v123
      %358 = vmatpush1.msra.mxu0 %v122
      %359 = vmatprep.subr.mxu0 %v133
      %360 = vmatpush1.msra.mxu0 %v132
      %361 = vmatprep.subr.mxu0 0.0
      %362 = vmatpush1.msra.mxu0 0.0
      %363 = vmatprep.subr.mxu0 0.0
      %364 = vmatpush1.msra.mxu0 0.0
      %365 = vmatprep.subr.mxu0 0.0
      %366 = vmatpush1.msra.mxu0 0.0
      %367 = vmatprep.subr.mxu0 0.0
      %368 = vmatpush1.msra.mxu0 0.0
      %369 = vmatprep.subr.mxu0 0.0
      %370 = vmatpush1.msra.mxu0 0.0
      %371 = vmatprep.subr.mxu0 0.0
      %372 = vmatpush1.msra.mxu0 0.0
      %373 = vmatprep.subr.mxu0 0.0
      %374 = vmatpush1.msra.mxu0 0.0
      %375 = vmatprep.subr.mxu0 0.0
      %376 = vmatpush1.msra.mxu0 0.0
      %377 = vmatprep.subr.mxu0 0.0
      %378 = vmatpush1.msra.mxu0 0.0
      %379 = vmatprep.subr.mxu0 0.0
      %380 = vmatpush1.msra.mxu0 0.0
      %381 = vmatprep.subr.mxu0 0.0
      %382 = vmatpush1.msra.mxu0 0.0
      %383 = vmatprep.subr.mxu0 0.0
      %384 = vmatpush1.msra.mxu0 0.0
      %385 = vmatprep.subr.mxu0 0.0
      %386 = vmatpush1.msra.mxu0 0.0
      %387 = vmatprep.subr.mxu0 0.0
      %388 = vmatpush1.msra.mxu0 0.0
      %389 = vmatprep.subr.mxu0 0.0
      %390 = vmatpush1.msra.mxu0 0.0
      %391 = vmatprep.subr.mxu0 0.0
      %392 = vmatpush1.msra.mxu0 0.0
      %393 = vmatprep.subr.mxu0 0.0
      %394 = vmatpush1.msra.mxu0 0.0
      %395 = vmatprep.subr.mxu0 0.0
      %396 = vmatpush1.msra.mxu0 0.0
      %397 = vmatprep.subr.mxu0 0.0
      %398 = vmatpush1.msra.mxu0 0.0
      %399 = vmatprep.subr.mxu0 0.0
      %400 = vmatpush1.msra.mxu0 0.0
      %401 = vmatprep.subr.mxu0 0.0
      %402 = vmatpush1.msra.mxu0 0.0
      %403 = vmatprep.subr.mxu0 0.0
      %404 = vmatpush1.msra.mxu0 0.0
      %405 = vmatprep.subr.mxu0 0.0
      %406 = vmatpush1.msra.mxu0 0.0
      %407 = vmatprep.subr.mxu0 0.0
      %408 = vmatpush1.msra.mxu0 0.0
      %409 = vmatprep.subr.mxu0 0.0
      %410 = vmatpush1.msra.mxu0 0.0
      %411 = vmatprep.subr.mxu0 0.0
      %412 = vmatpush1.msra.mxu0 0.0
      %413 = vmatprep.subr.mxu0 0.0
      %414 = vmatpush1.msra.mxu0 0.0
      %415 = vmatprep.subr.mxu0 0.0
      %416 = vmatpush1.msra.mxu0 0.0
      %417 = vmatprep.mubr.f32.mxu0 0.0
      %418 = vmatmul.mubr.f32.gmra.mrb[0].mxu0 %v138
      %v419 = vpop.f32.mrb[0].mxu0
      %v420 = vadd.f32 0.0, %v419
      %v421 = vpop.f32.mrb[0].mxu0
      %v422 = vadd.f32 0.0, %v421
      %423 = vdwg.mxu0
      %424 = vmatprep.subr.mxu0 %v105
      %425 = vmatpush1.msra.mxu0 %v104
      %426 = vmatprep.subr.mxu0 %v115
      %427 = vmatpush1.msra.mxu0 %v114
      %428 = vmatprep.subr.mxu0 %v125
      %429 = vmatpush1.msra.mxu0 %v124
      %430 = vmatprep.subr.mxu0 %v135
      %431 = vmatpush1.msra.mxu0 %v134
      %432 = vmatprep.subr.mxu0 0.0
      %433 = vmatpush1.msra.mxu0 0.0
      %434 = vmatprep.subr.mxu0 0.0
      %435 = vmatpush1.msra.mxu0 0.0
      %436 = vmatprep.subr.mxu0 0.0
      %437 = vmatpush1.msra.mxu0 0.0
      %438 = vmatprep.subr.mxu0 0.0
      %439 = vmatpush1.msra.mxu0 0.0
      %440 = vmatprep.subr.mxu0 0.0
      %441 = vmatpush1.msra.mxu0 0.0
      %442 = vmatprep.subr.mxu0 0.0
      %443 = vmatpush1.msra.mxu0 0.0
      %444 = vmatprep.subr.mxu0 0.0
      %445 = vmatpush1.msra.mxu0 0.0
      %446 = vmatprep.subr.mxu0 0.0
      %447 = vmatpush1.msra.mxu0 0.0
      %448 = vmatprep.subr.mxu0 0.0
      %449 = vmatpush1.msra.mxu0 0.0
      %450 = vmatprep.subr.mxu0 0.0
      %451 = vmatpush1.msra.mxu0 0.0
      %452 = vmatprep.subr.mxu0 0.0
      %453 = vmatpush1.msra.mxu0 0.0
      %454 = vmatprep.subr.mxu0 0.0
      %455 = vmatpush1.msra.mxu0 0.0
      %456 = vmatprep.subr.mxu0 0.0
      %457 = vmatpush1.msra.mxu0 0.0
      %458 = vmatprep.subr.mxu0 0.0
      %459 = vmatpush1.msra.mxu0 0.0
      %460 = vmatprep.subr.mxu0 0.0
      %461 = vmatpush1.msra.mxu0 0.0
      %462 = vmatprep.subr.mxu0 0.0
      %463 = vmatpush1.msra.mxu0 0.0
      %464 = vmatprep.subr.mxu0 0.0
      %465 = vmatpush1.msra.mxu0 0.0
      %466 = vmatprep.subr.mxu0 0.0
      %467 = vmatpush1.msra.mxu0 0.0
      %468 = vmatprep.subr.mxu0 0.0
      %469 = vmatpush1.msra.mxu0 0.0
      %470 = vmatprep.subr.mxu0 0.0
      %471 = vmatpush1.msra.mxu0 0.0
      %472 = vmatprep.subr.mxu0 0.0
      %473 = vmatpush1.msra.mxu0 0.0
      %474 = vmatprep.subr.mxu0 0.0
      %475 = vmatpush1.msra.mxu0 0.0
      %476 = vmatprep.subr.mxu0 0.0
      %477 = vmatpush1.msra.mxu0 0.0
      %478 = vmatprep.subr.mxu0 0.0
      %479 = vmatpush1.msra.mxu0 0.0
      %480 = vmatprep.subr.mxu0 0.0
      %481 = vmatpush1.msra.mxu0 0.0
      %482 = vmatprep.subr.mxu0 0.0
      %483 = vmatpush1.msra.mxu0 0.0
      %484 = vmatprep.subr.mxu0 0.0
      %485 = vmatpush1.msra.mxu0 0.0
      %486 = vmatprep.subr.mxu0 0.0
      %487 = vmatpush1.msra.mxu0 0.0
      %488 = vmatprep.mubr.f32.mxu0 0.0
      %489 = vmatmul.mubr.f32.gmra.mrb[0].mxu0 %v138
      %v490 = vpop.f32.mrb[0].mxu0
      %v491 = vadd.f32 0.0, %v490
      %v492 = vpop.f32.mrb[0].mxu0
      %v493 = vadd.f32 0.0, %v492
      %494 = vdwg.mxu0
      %vm495 = vcmask 56320
      %v497 = vsel %vm495, %v74, 0
      %vm499 = vcmask 1046528
      %v501 = vsel %vm499, %v86, 0
      %v504 = vsel %vm499, %v87, 0
      %v507 = vsel %vm499, %v88, 0
      %v510 = vsel %vm499, %v89, 0
      %v513 = vsel %vm499, %v90, 0
      %v516 = vsel %vm499, %v91, 0
      %v519 = vsel %vm499, %v92, 0
      %v522 = vsel %vm499, %v93, 0
      %v525 = vsel %vm499, %v94, 0
      %v528 = vsel %vm499, %v95, 0
      %530 = vmatprep.subr.mxu0 %v504
      %531 = vmatpush1.msra.mxu0 %v501
      %532 = vmatprep.subr.mxu0 0.0
      %533 = vmatpush1.msra.mxu0 0.0
      %534 = vmatprep.subr.mxu0 0.0
      %535 = vmatpush1.msra.mxu0 0.0
      %536 = vmatprep.subr.mxu0 0.0
      %537 = vmatpush1.msra.mxu0 0.0
      %538 = vmatprep.subr.mxu0 0.0
      %539 = vmatpush1.msra.mxu0 0.0
      %540 = vmatprep.subr.mxu0 0.0
      %541 = vmatpush1.msra.mxu0 0.0
      %542 = vmatprep.subr.mxu0 0.0
      %543 = vmatpush1.msra.mxu0 0.0
      %544 = vmatprep.subr.mxu0 0.0
      %545 = vmatpush1.msra.mxu0 0.0
      %546 = vmatprep.subr.mxu0 0.0
      %547 = vmatpush1.msra.mxu0 0.0
      %548 = vmatprep.subr.mxu0 0.0
      %549 = vmatpush1.msra.mxu0 0.0
      %550 = vmatprep.subr.mxu0 0.0
      %551 = vmatpush1.msra.mxu0 0.0
      %552 = vmatprep.subr.mxu0 0.0
      %553 = vmatpush1.msra.mxu0 0.0
      %554 = vmatprep.subr.mxu0 0.0
      %555 = vmatpush1.msra.mxu0 0.0
      %556 = vmatprep.subr.mxu0 0.0
      %557 = vmatpush1.msra.mxu0 0.0
      %558 = vmatprep.subr.mxu0 0.0
      %559 = vmatpush1.msra.mxu0 0.0
      %560 = vmatprep.subr.mxu0 0.0
      %561 = vmatpush1.msra.mxu0 0.0
      %562 = vmatprep.subr.mxu0 0.0
      %563 = vmatpush1.msra.mxu0 0.0
      %564 = vmatprep.subr.mxu0 0.0
      %565 = vmatpush1.msra.mxu0 0.0
      %566 = vmatprep.subr.mxu0 0.0
      %567 = vmatpush1.msra.mxu0 0.0
      %568 = vmatprep.subr.mxu0 0.0
      %569 = vmatpush1.msra.mxu0 0.0
      %570 = vmatprep.subr.mxu0 0.0
      %571 = vmatpush1.msra.mxu0 0.0
      %572 = vmatprep.subr.mxu0 0.0
      %573 = vmatpush1.msra.mxu0 0.0
      %574 = vmatprep.subr.mxu0 0.0
      %575 = vmatpush1.msra.mxu0 0.0
      %576 = vmatprep.subr.mxu0 0.0
      %577 = vmatpush1.msra.mxu0 0.0
      %578 = vmatprep.subr.mxu0 0.0
      %579 = vmatpush1.msra.mxu0 0.0
      %580 = vmatprep.subr.mxu0 0.0
      %581 = vmatpush1.msra.mxu0 0.0
      %582 = vmatprep.subr.mxu0 0.0
      %583 = vmatpush1.msra.mxu0 0.0
      %584 = vmatprep.subr.mxu0 0.0
      %585 = vmatpush1.msra.mxu0 0.0
      %586 = vmatprep.subr.mxu0 0.0
      %587 = vmatpush1.msra.mxu0 0.0
      %588 = vmatprep.subr.mxu0 0.0
      %589 = vmatpush1.msra.mxu0 0.0
      %590 = vmatprep.subr.mxu0 0.0
      %591 = vmatpush1.msra.mxu0 0.0
      %592 = vmatprep.subr.mxu0 0.0
      %593 = vmatpush1.msra.mxu0 0.0
      %594 = vmatprep.mubr.f32.mxu0 0.0
      %595 = vmatmul.mubr.f32.gmra.mrb[0].mxu0 %v497
      %v596 = vpop.f32.mrb[0].mxu0
      %v597 = vadd.f32 %v207, %v596
      %v598 = vpop.f32.mrb[0].mxu0
      %v599 = vadd.f32 %v209, %v598
      %600 = vdwg.mxu0
      %601 = vmatprep.subr.mxu0 %v510
      %602 = vmatpush1.msra.mxu0 %v507
      %603 = vmatprep.subr.mxu0 0.0
      %604 = vmatpush1.msra.mxu0 0.0
      %605 = vmatprep.subr.mxu0 0.0
      %606 = vmatpush1.msra.mxu0 0.0
      %607 = vmatprep.subr.mxu0 0.0
      %608 = vmatpush1.msra.mxu0 0.0
      %609 = vmatprep.subr.mxu0 0.0
      %610 = vmatpush1.msra.mxu0 0.0
      %611 = vmatprep.subr.mxu0 0.0
      %612 = vmatpush1.msra.mxu0 0.0
      %613 = vmatprep.subr.mxu0 0.0
      %614 = vmatpush1.msra.mxu0 0.0
      %615 = vmatprep.subr.mxu0 0.0
      %616 = vmatpush1.msra.mxu0 0.0
      %617 = vmatprep.subr.mxu0 0.0
      %618 = vmatpush1.msra.mxu0 0.0
      %619 = vmatprep.subr.mxu0 0.0
      %620 = vmatpush1.msra.mxu0 0.0
      %621 = vmatprep.subr.mxu0 0.0
      %622 = vmatpush1.msra.mxu0 0.0
      %623 = vmatprep.subr.mxu0 0.0
      %624 = vmatpush1.msra.mxu0 0.0
      %625 = vmatprep.subr.mxu0 0.0
      %626 = vmatpush1.msra.mxu0 0.0
      %627 = vmatprep.subr.mxu0 0.0
      %628 = vmatpush1.msra.mxu0 0.0
      %629 = vmatprep.subr.mxu0 0.0
      %630 = vmatpush1.msra.mxu0 0.0
      %631 = vmatprep.subr.mxu0 0.0
      %632 = vmatpush1.msra.mxu0 0.0
      %633 = vmatprep.subr.mxu0 0.0
      %634 = vmatpush1.msra.mxu0 0.0
      %635 = vmatprep.subr.mxu0 0.0
      %636 = vmatpush1.msra.mxu0 0.0
      %637 = vmatprep.subr.mxu0 0.0
      %638 = vmatpush1.msra.mxu0 0.0
      %639 = vmatprep.subr.mxu0 0.0
      %640 = vmatpush1.msra.mxu0 0.0
      %641 = vmatprep.subr.mxu0 0.0
      %642 = vmatpush1.msra.mxu0 0.0
      %643 = vmatprep.subr.mxu0 0.0
      %644 = vmatpush1.msra.mxu0 0.0
      %645 = vmatprep.subr.mxu0 0.0
      %646 = vmatpush1.msra.mxu0 0.0
      %647 = vmatprep.subr.mxu0 0.0
      %648 = vmatpush1.msra.mxu0 0.0
      %649 = vmatprep.subr.mxu0 0.0
      %650 = vmatpush1.msra.mxu0 0.0
      %651 = vmatprep.subr.mxu0 0.0
      %652 = vmatpush1.msra.mxu0 0.0
      %653 = vmatprep.subr.mxu0 0.0
      %654 = vmatpush1.msra.mxu0 0.0
      %655 = vmatprep.subr.mxu0 0.0
      %656 = vmatpush1.msra.mxu0 0.0
      %657 = vmatprep.subr.mxu0 0.0
      %658 = vmatpush1.msra.mxu0 0.0
      %659 = vmatprep.subr.mxu0 0.0
      %660 = vmatpush1.msra.mxu0 0.0
      %661 = vmatprep.subr.mxu0 0.0
      %662 = vmatpush1.msra.mxu0 0.0
      %663 = vmatprep.subr.mxu0 0.0
      %664 = vmatpush1.msra.mxu0 0.0
      %665 = vmatprep.mubr.f32.mxu0 0.0
      %666 = vmatmul.mubr.f32.gmra.mrb[0].mxu0 %v497
      %v667 = vpop.f32.mrb[0].mxu0
      %v668 = vadd.f32 %v278, %v667
      %v669 = vpop.f32.mrb[0].mxu0
      %v670 = vadd.f32 %v280, %v669
      %671 = vdwg.mxu0
      %672 = vmatprep.subr.mxu0 %v516
      %673 = vmatpush1.msra.mxu0 %v513
      %674 = vmatprep.subr.mxu0 0.0
      %675 = vmatpush1.msra.mxu0 0.0
      %676 = vmatprep.subr.mxu0 0.0
      %677 = vmatpush1.msra.mxu0 0.0
      %678 = vmatprep.subr.mxu0 0.0
      %679 = vmatpush1.msra.mxu0 0.0
      %680 = vmatprep.subr.mxu0 0.0
      %681 = vmatpush1.msra.mxu0 0.0
      %682 = vmatprep.subr.mxu0 0.0
      %683 = vmatpush1.msra.mxu0 0.0
      %684 = vmatprep.subr.mxu0 0.0
      %685 = vmatpush1.msra.mxu0 0.0
      %686 = vmatprep.subr.mxu0 0.0
      %687 = vmatpush1.msra.mxu0 0.0
      %688 = vmatprep.subr.mxu0 0.0
      %689 = vmatpush1.msra.mxu0 0.0
      %690 = vmatprep.subr.mxu0 0.0
      %691 = vmatpush1.msra.mxu0 0.0
      %692 = vmatprep.subr.mxu0 0.0
      %693 = vmatpush1.msra.mxu0 0.0
      %694 = vmatprep.subr.mxu0 0.0
      %695 = vmatpush1.msra.mxu0 0.0
      %696 = vmatprep.subr.mxu0 0.0
      %697 = vmatpush1.msra.mxu0 0.0
      %698 = vmatprep.subr.mxu0 0.0
      %699 = vmatpush1.msra.mxu0 0.0
      %700 = vmatprep.subr.mxu0 0.0
      %701 = vmatpush1.msra.mxu0 0.0
      %702 = vmatprep.subr.mxu0 0.0
      %703 = vmatpush1.msra.mxu0 0.0
      %704 = vmatprep.subr.mxu0 0.0
      %705 = vmatpush1.msra.mxu0 0.0
      %706 = vmatprep.subr.mxu0 0.0
      %707 = vmatpush1.msra.mxu0 0.0
      %708 = vmatprep.subr.mxu0 0.0
      %709 = vmatpush1.msra.mxu0 0.0
      %710 = vmatprep.subr.mxu0 0.0
      %711 = vmatpush1.msra.mxu0 0.0
      %712 = vmatprep.subr.mxu0 0.0
      %713 = vmatpush1.msra.mxu0 0.0
      %714 = vmatprep.subr.mxu0 0.0
      %715 = vmatpush1.msra.mxu0 0.0
      %716 = vmatprep.subr.mxu0 0.0
      %717 = vmatpush1.msra.mxu0 0.0
      %718 = vmatprep.subr.mxu0 0.0
      %719 = vmatpush1.msra.mxu0 0.0
      %720 = vmatprep.subr.mxu0 0.0
      %721 = vmatpush1.msra.mxu0 0.0
      %722 = vmatprep.subr.mxu0 0.0
      %723 = vmatpush1.msra.mxu0 0.0
      %724 = vmatprep.subr.mxu0 0.0
      %725 = vmatpush1.msra.mxu0 0.0
      %726 = vmatprep.subr.mxu0 0.0
      %727 = vmatpush1.msra.mxu0 0.0
      %728 = vmatprep.subr.mxu0 0.0
      %729 = vmatpush1.msra.mxu0 0.0
      %730 = vmatprep.subr.mxu0 0.0
      %731 = vmatpush1.msra.mxu0 0.0
      %732 = vmatprep.subr.mxu0 0.0
      %733 = vmatpush1.msra.mxu0 0.0
      %734 = vmatprep.subr.mxu0 0.0
      %735 = vmatpush1.msra.mxu0 0.0
      %736 = vmatprep.mubr.f32.mxu0 0.0
      %737 = vmatmul.mubr.f32.gmra.mrb[0].mxu0 %v497
      %v738 = vpop.f32.mrb[0].mxu0
      %v739 = vadd.f32 %v349, %v738
      %v740 = vpop.f32.mrb[0].mxu0
      %v741 = vadd.f32 %v351, %v740
      %742 = vdwg.mxu0
      %743 = vmatprep.subr.mxu0 %v522
      %744 = vmatpush1.msra.mxu0 %v519
      %745 = vmatprep.subr.mxu0 0.0
      %746 = vmatpush1.msra.mxu0 0.0
      %747 = vmatprep.subr.mxu0 0.0
      %748 = vmatpush1.msra.mxu0 0.0
      %749 = vmatprep.subr.mxu0 0.0
      %750 = vmatpush1.msra.mxu0 0.0
      %751 = vmatprep.subr.mxu0 0.0
      %752 = vmatpush1.msra.mxu0 0.0
      %753 = vmatprep.subr.mxu0 0.0
      %754 = vmatpush1.msra.mxu0 0.0
      %755 = vmatprep.subr.mxu0 0.0
      %756 = vmatpush1.msra.mxu0 0.0
      %757 = vmatprep.subr.mxu0 0.0
      %758 = vmatpush1.msra.mxu0 0.0
      %759 = vmatprep.subr.mxu0 0.0
      %760 = vmatpush1.msra.mxu0 0.0
      %761 = vmatprep.subr.mxu0 0.0
      %762 = vmatpush1.msra.mxu0 0.0
      %763 = vmatprep.subr.mxu0 0.0
      %764 = vmatpush1.msra.mxu0 0.0
      %765 = vmatprep.subr.mxu0 0.0
      %766 = vmatpush1.msra.mxu0 0.0
      %767 = vmatprep.subr.mxu0 0.0
      %768 = vmatpush1.msra.mxu0 0.0
      %769 = vmatprep.subr.mxu0 0.0
      %770 = vmatpush1.msra.mxu0 0.0
      %771 = vmatprep.subr.mxu0 0.0
      %772 = vmatpush1.msra.mxu0 0.0
      %773 = vmatprep.subr.mxu0 0.0
      %774 = vmatpush1.msra.mxu0 0.0
      %775 = vmatprep.subr.mxu0 0.0
      %776 = vmatpush1.msra.mxu0 0.0
      %777 = vmatprep.subr.mxu0 0.0
      %778 = vmatpush1.msra.mxu0 0.0
      %779 = vmatprep.subr.mxu0 0.0
      %780 = vmatpush1.msra.mxu0 0.0
      %781 = vmatprep.subr.mxu0 0.0
      %782 = vmatpush1.msra.mxu0 0.0
      %783 = vmatprep.subr.mxu0 0.0
      %784 = vmatpush1.msra.mxu0 0.0
      %785 = vmatprep.subr.mxu0 0.0
      %786 = vmatpush1.msra.mxu0 0.0
      %787 = vmatprep.subr.mxu0 0.0
      %788 = vmatpush1.msra.mxu0 0.0
      %789 = vmatprep.subr.mxu0 0.0
      %790 = vmatpush1.msra.mxu0 0.0
      %791 = vmatprep.subr.mxu0 0.0
      %792 = vmatpush1.msra.mxu0 0.0
      %793 = vmatprep.subr.mxu0 0.0
      %794 = vmatpush1.msra.mxu0 0.0
      %795 = vmatprep.subr.mxu0 0.0
      %796 = vmatpush1.msra.mxu0 0.0
      %797 = vmatprep.subr.mxu0 0.0
      %798 = vmatpush1.msra.mxu0 0.0
      %799 = vmatprep.subr.mxu0 0.0
      %800 = vmatpush1.msra.mxu0 0.0
      %801 = vmatprep.subr.mxu0 0.0
      %802 = vmatpush1.msra.mxu0 0.0
      %803 = vmatprep.subr.mxu0 0.0
      %804 = vmatpush1.msra.mxu0 0.0
      %805 = vmatprep.subr.mxu0 0.0
      %806 = vmatpush1.msra.mxu0 0.0
      %807 = vmatprep.mubr.f32.mxu0 0.0
      %808 = vmatmul.mubr.f32.gmra.mrb[0].mxu0 %v497
      %v809 = vpop.f32.mrb[0].mxu0
      %v810 = vadd.f32 %v420, %v809
      %v811 = vpop.f32.mrb[0].mxu0
      %v812 = vadd.f32 %v422, %v811
      %813 = vdwg.mxu0
      %814 = vmatprep.subr.mxu0 %v528
      %815 = vmatpush1.msra.mxu0 %v525
      %816 = vmatprep.subr.mxu0 0.0
      %817 = vmatpush1.msra.mxu0 0.0
      %818 = vmatprep.subr.mxu0 0.0
      %819 = vmatpush1.msra.mxu0 0.0
      %820 = vmatprep.subr.mxu0 0.0
      %821 = vmatpush1.msra.mxu0 0.0
      %822 = vmatprep.subr.mxu0 0.0
      %823 = vmatpush1.msra.mxu0 0.0
      %824 = vmatprep.subr.mxu0 0.0
      %825 = vmatpush1.msra.mxu0 0.0
      %826 = vmatprep.subr.mxu0 0.0
      %827 = vmatpush1.msra.mxu0 0.0
      %828 = vmatprep.subr.mxu0 0.0
      %829 = vmatpush1.msra.mxu0 0.0
      %830 = vmatprep.subr.mxu0 0.0
      %831 = vmatpush1.msra.mxu0 0.0
      %832 = vmatprep.subr.mxu0 0.0
      %833 = vmatpush1.msra.mxu0 0.0
      %834 = vmatprep.subr.mxu0 0.0
      %835 = vmatpush1.msra.mxu0 0.0
      %836 = vmatprep.subr.mxu0 0.0
      %837 = vmatpush1.msra.mxu0 0.0
      %838 = vmatprep.subr.mxu0 0.0
      %839 = vmatpush1.msra.mxu0 0.0
      %840 = vmatprep.subr.mxu0 0.0
      %841 = vmatpush1.msra.mxu0 0.0
      %842 = vmatprep.subr.mxu0 0.0
      %843 = vmatpush1.msra.mxu0 0.0
      %844 = vmatprep.subr.mxu0 0.0
      %845 = vmatpush1.msra.mxu0 0.0
      %846 = vmatprep.subr.mxu0 0.0
      %847 = vmatpush1.msra.mxu0 0.0
      %848 = vmatprep.subr.mxu0 0.0
      %849 = vmatpush1.msra.mxu0 0.0
      %850 = vmatprep.subr.mxu0 0.0
      %851 = vmatpush1.msra.mxu0 0.0
      %852 = vmatprep.subr.mxu0 0.0
      %853 = vmatpush1.msra.mxu0 0.0
      %854 = vmatprep.subr.mxu0 0.0
      %855 = vmatpush1.msra.mxu0 0.0
      %856 = vmatprep.subr.mxu0 0.0
      %857 = vmatpush1.msra.mxu0 0.0
      %858 = vmatprep.subr.mxu0 0.0
      %859 = vmatpush1.msra.mxu0 0.0
      %860 = vmatprep.subr.mxu0 0.0
      %861 = vmatpush1.msra.mxu0 0.0
      %862 = vmatprep.subr.mxu0 0.0
      %863 = vmatpush1.msra.mxu0 0.0
      %864 = vmatprep.subr.mxu0 0.0
      %865 = vmatpush1.msra.mxu0 0.0
      %866 = vmatprep.subr.mxu0 0.0
      %867 = vmatpush1.msra.mxu0 0.0
      %868 = vmatprep.subr.mxu0 0.0
      %869 = vmatpush1.msra.mxu0 0.0
      %870 = vmatprep.subr.mxu0 0.0
      %871 = vmatpush1.msra.mxu0 0.0
      %872 = vmatprep.subr.mxu0 0.0
      %873 = vmatpush1.msra.mxu0 0.0
      %874 = vmatprep.subr.mxu0 0.0
      %875 = vmatpush1.msra.mxu0 0.0
      %876 = vmatprep.subr.mxu0 0.0
      %877 = vmatpush1.msra.mxu0 0.0
      %878 = vmatprep.mubr.f32.mxu0 0.0
      %879 = vmatmul.mubr.f32.gmra.mrb[0].mxu0 %v497
      %v880 = vpop.f32.mrb[0].mxu0
      %v881 = vadd.f32 %v491, %v880
      %v882 = vpop.f32.mrb[0].mxu0
      %v883 = vadd.f32 %v493, %v882
      %884 = vdwg.mxu0
      %v885 = vld [vmem:[%s4] sm:$0xff]
      %v886 = vld [vmem:[%s4 + $0x8] sm:$0x3]
      %v889 = vlaneseq
      %v890 = vshrl.u32 %v889, 7
      %v891 = vsub.s32 0, %v890
      %v892 = vrot.slane %v885, %v891
      %v893 = vlaneseq
      %v894 = vshrl.u32 %v893, 7
      %v895 = vsub.s32 1, %v894
      %v896 = vrot.slane %v885, %v895
      %v897 = vlaneseq
      %v898 = vshrl.u32 %v897, 7
      %v899 = vsub.s32 2, %v898
      %v900 = vrot.slane %v885, %v899
      %v901 = vlaneseq
      %v902 = vshrl.u32 %v901, 7
      %v903 = vsub.s32 3, %v902
      %v904 = vrot.slane %v885, %v903
      %v905 = vlaneseq
      %v906 = vshrl.u32 %v905, 7
      %v907 = vsub.s32 4, %v906
      %v908 = vrot.slane %v885, %v907
      %v909 = vlaneseq
      %v910 = vshrl.u32 %v909, 7
      %v911 = vsub.s32 5, %v910
      %v912 = vrot.slane %v885, %v911
      %v913 = vlaneseq
      %v914 = vshrl.u32 %v913, 7
      %v915 = vsub.s32 6, %v914
      %v916 = vrot.slane %v885, %v915
      %v917 = vlaneseq
      %v918 = vshrl.u32 %v917, 7
      %v919 = vsub.s32 7, %v918
      %v920 = vrot.slane %v885, %v919
      %v921 = vlaneseq
      %v922 = vshrl.u32 %v921, 7
      %v923 = vsub.s32 0, %v922
      %v924 = vrot.slane %v886, %v923
      %v925 = vlaneseq
      %v926 = vshrl.u32 %v925, 7
      %v927 = vsub.s32 1, %v926
      %v928 = vrot.slane %v886, %v927
      %v939 = vadd.f32 %v597, %v892
      %v940 = vadd.f32 %v599, %v896
      %v941 = vadd.f32 %v668, %v900
      %v942 = vadd.f32 %v670, %v904
      %v943 = vadd.f32 %v739, %v908
      %v944 = vadd.f32 %v741, %v912
      %v945 = vadd.f32 %v810, %v916
      %v946 = vadd.f32 %v812, %v920
      %v947 = vadd.f32 %v881, %v924
      %v948 = vadd.f32 %v883, %v928
      %950 = vrot.lane.b32.xlu0 %v939, 96
      %v951 = vpop.permute.xlu0 %950
      %953 = vrot.lane.b32.xlu0 %v939, 64
      %v954 = vpop.permute.xlu0 %953
      %956 = vrot.lane.b32.xlu0 %v939, 32
      %v957 = vpop.permute.xlu0 %956
      %v959 = vcombine.low %v939, %v954
      %v961 = vunpack.c.l.s4 1983009808
      %v962 = vunpack.c.0.s8 %v961
      %v963 = vlaneseq
      %v964 = vshrl.u32 %v963, 7
      %v965 = vsub.s32 %v962, %v964
      %v966 = vrot.slane %v959, %v965
      %v967 = vcombine.low %v951, %v957
      %v969 = vunpack.c.l.s4 1983009808
      %v970 = vunpack.c.0.s8 %v969
      %v971 = vlaneseq
      %v972 = vshrl.u32 %v971, 7
      %v973 = vsub.s32 %v970, %v972
      %v974 = vrot.slane %v967, %v973
      %v975 = vcombine.low %v966, %v974
      %v977 = vunpack.c.l.s4 1934713408
      %v978 = vunpack.c.0.s8 %v977
      %v979 = vlaneseq
      %v980 = vshrl.u32 %v979, 7
      %v981 = vsub.s32 %v978, %v980
      %v982 = vrot.slane %v975, %v981
      %v983 = vcombine.high %v982, 0.0
      %vm984 = vcmask 257024
      %v985 = vsel %vm984, %v982, -inf
      %986 = vmax.xlane.f32.xlu0 %v985
      %v987 = vpop.xlane.xlu0 %986
      %v988 = vsel %vm984, %v983, -inf
      %989 = vmax.xlane.f32.xlu0 %v988
      %v990 = vpop.xlane.xlu0 %989
      %v991 = vsub.f32 %v982, %v987
      %v992 = vsub.f32 %v983, %v990
      %v993 = vmul.f32 %v991, 1.442695
      %v994 = vpow.pop %v993
      %v995 = vmul.f32 %v992, 1.442695
      %v996 = vpow.pop %v995
      %v997 = vsel %vm984, %v994, 0.0
      %998 = vadd.xlane.f32.xlu0 %v997
      %v999 = vpop.xlane.xlu0 %998
      %v1000 = vsel %vm984, %v996, 0.0
      %1001 = vadd.xlane.f32.xlu0 %v1000
      %v1002 = vpop.xlane.xlu0 %1001
      %v1003 = vrcp.pop %v999
      %v1004 = vrcp.pop %v1002
      %v1005 = vmul.f32 %v999, %v1003
      %v1006 = vmul.f32 %v1002, %v1004
      %v1007 = vsub.f32 2.0, %v1005
      %v1008 = vsub.f32 2.0, %v1006
      %v1009 = vmul.f32 %v1003, %v1007
      %v1010 = vmul.f32 %v1004, %v1008
      %v1011 = vmul.f32 %v994, %v1009
      %v1012 = vmul.f32 %v996, %v1010
      %1014 = vrot.lane.b32.xlu0 %v940, 96
      %v1015 = vpop.permute.xlu0 %1014
      %1017 = vrot.lane.b32.xlu0 %v940, 64
      %v1018 = vpop.permute.xlu0 %1017
      %1020 = vrot.lane.b32.xlu0 %v940, 32
      %v1021 = vpop.permute.xlu0 %1020
      %1024 = vrot.lane.b32.xlu0 %v941, 96
      %v1025 = vpop.permute.xlu0 %1024
      %1027 = vrot.lane.b32.xlu0 %v941, 64
      %v1028 = vpop.permute.xlu0 %1027
      %1030 = vrot.lane.b32.xlu0 %v941, 32
      %v1031 = vpop.permute.xlu0 %1030
      %1034 = vrot.lane.b32.xlu0 %v942, 96
      %v1035 = vpop.permute.xlu0 %1034
      %1037 = vrot.lane.b32.xlu0 %v942, 64
      %v1038 = vpop.permute.xlu0 %1037
      %1040 = vrot.lane.b32.xlu0 %v942, 32
      %v1041 = vpop.permute.xlu0 %1040
      %1044 = vrot.lane.b32.xlu0 %v943, 96
      %v1045 = vpop.permute.xlu0 %1044
      %1047 = vrot.lane.b32.xlu0 %v943, 64
      %v1048 = vpop.permute.xlu0 %1047
      %1050 = vrot.lane.b32.xlu0 %v943, 32
      %v1051 = vpop.permute.xlu0 %1050
      %1054 = vrot.lane.b32.xlu0 %v944, 96
      %v1055 = vpop.permute.xlu0 %1054
      %1057 = vrot.lane.b32.xlu0 %v944, 64
      %v1058 = vpop.permute.xlu0 %1057
      %1060 = vrot.lane.b32.xlu0 %v944, 32
      %v1061 = vpop.permute.xlu0 %1060
      %1064 = vrot.lane.b32.xlu0 %v945, 96
      %v1065 = vpop.permute.xlu0 %1064
      %1067 = vrot.lane.b32.xlu0 %v945, 64
      %v1068 = vpop.permute.xlu0 %1067
      %1070 = vrot.lane.b32.xlu0 %v945, 32
      %v1071 = vpop.permute.xlu0 %1070
      %1074 = vrot.lane.b32.xlu0 %v946, 96
      %v1075 = vpop.permute.xlu0 %1074
      %1077 = vrot.lane.b32.xlu0 %v946, 64
      %v1078 = vpop.permute.xlu0 %1077
      %1080 = vrot.lane.b32.xlu0 %v946, 32
      %v1081 = vpop.permute.xlu0 %1080
      %1084 = vrot.lane.b32.xlu0 %v947, 96
      %v1085 = vpop.permute.xlu0 %1084
      %1087 = vrot.lane.b32.xlu0 %v947, 64
      %v1088 = vpop.permute.xlu0 %1087
      %1090 = vrot.lane.b32.xlu0 %v947, 32
      %v1091 = vpop.permute.xlu0 %1090
      %v1093 = vcombine.low %v940, %v1018
      %v1095 = vunpack.c.l.s4 1983009808
      %v1096 = vunpack.c.0.s8 %v1095
      %v1097 = vlaneseq
      %v1098 = vshrl.u32 %v1097, 7
      %v1099 = vsub.s32 %v1096, %v1098
      %v1100 = vrot.slane %v1093, %v1099
      %v1101 = vcombine.low %v1015, %v1021
      %v1103 = vunpack.c.l.s4 1983009808
      %v1104 = vunpack.c.0.s8 %v1103
      %v1105 = vlaneseq
      %v1106 = vshrl.u32 %v1105, 7
      %v1107 = vsub.s32 %v1104, %v1106
      %v1108 = vrot.slane %v1101, %v1107
      %v1109 = vcombine.low %v941, %v1028
      %v1111 = vunpack.c.l.s4 1983009808
      %v1112 = vunpack.c.0.s8 %v1111
      %v1113 = vlaneseq
      %v1114 = vshrl.u32 %v1113, 7
      %v1115 = vsub.s32 %v1112, %v1114
      %v1116 = vrot.slane %v1109, %v1115
      %v1117 = vcombine.low %v1025, %v1031
      %v1119 = vunpack.c.l.s4 1983009808
      %v1120 = vunpack.c.0.s8 %v1119
      %v1121 = vlaneseq
      %v1122 = vshrl.u32 %v1121, 7
      %v1123 = vsub.s32 %v1120, %v1122
      %v1124 = vrot.slane %v1117, %v1123
      %v1125 = vcombine.low %v1100, %v1108
      %v1127 = vunpack.c.l.s4 1934713408
      %v1128 = vunpack.c.0.s8 %v1127
      %v1129 = vlaneseq
      %v1130 = vshrl.u32 %v1129, 7
      %v1131 = vsub.s32 %v1128, %v1130
      %v1132 = vrot.slane %v1125, %v1131
      %v1133 = vcombine.low %v1116, %v1124
      %v1135 = vunpack.c.l.s4 1934713408
      %v1136 = vunpack.c.0.s8 %v1135
      %v1137 = vlaneseq
      %v1138 = vshrl.u32 %v1137, 7
      %v1139 = vsub.s32 %v1136, %v1138
      %v1140 = vrot.slane %v1133, %v1139
      %v1141 = vcombine.low %v1132, %v1140
      %v1142 = vcombine.high %v1132, %v1140
      %v1143 = vcombine.low %v942, %v1038
      %v1145 = vunpack.c.l.s4 1983009808
      %v1146 = vunpack.c.0.s8 %v1145
      %v1147 = vlaneseq
      %v1148 = vshrl.u32 %v1147, 7
      %v1149 = vsub.s32 %v1146, %v1148
      %v1150 = vrot.slane %v1143, %v1149
      %v1151 = vcombine.low %v1035, %v1041
      %v1153 = vunpack.c.l.s4 1983009808
      %v1154 = vunpack.c.0.s8 %v1153
      %v1155 = vlaneseq
      %v1156 = vshrl.u32 %v1155, 7
      %v1157 = vsub.s32 %v1154, %v1156
      %v1158 = vrot.slane %v1151, %v1157
      %v1159 = vcombine.low %v943, %v1048
      %v1161 = vunpack.c.l.s4 1983009808
      %v1162 = vunpack.c.0.s8 %v1161
      %v1163 = vlaneseq
      %v1164 = vshrl.u32 %v1163, 7
      %v1165 = vsub.s32 %v1162, %v1164
      %v1166 = vrot.slane %v1159, %v1165
      %v1167 = vcombine.low %v1045, %v1051
      %v1169 = vunpack.c.l.s4 1983009808
      %v1170 = vunpack.c.0.s8 %v1169
      %v1171 = vlaneseq
      %v1172 = vshrl.u32 %v1171, 7
      %v1173 = vsub.s32 %v1170, %v1172
      %v1174 = vrot.slane %v1167, %v1173
      %v1175 = vcombine.low %v1150, %v1158
      %v1177 = vunpack.c.l.s4 1934713408
      %v1178 = vunpack.c.0.s8 %v1177
      %v1179 = vlaneseq
      %v1180 = vshrl.u32 %v1179, 7
      %v1181 = vsub.s32 %v1178, %v1180
      %v1182 = vrot.slane %v1175, %v1181
      %v1183 = vcombine.low %v1166, %v1174
      %v1185 = vunpack.c.l.s4 1934713408
      %v1186 = vunpack.c.0.s8 %v1185
      %v1187 = vlaneseq
      %v1188 = vshrl.u32 %v1187, 7
      %v1189 = vsub.s32 %v1186, %v1188
      %v1190 = vrot.slane %v1183, %v1189
      %v1191 = vcombine.low %v1182, %v1190
      %v1192 = vcombine.high %v1182, %v1190
      %v1193 = vcombine.low %v944, %v1058
      %v1195 = vunpack.c.l.s4 1983009808
      %v1196 = vunpack.c.0.s8 %v1195
      %v1197 = vlaneseq
      %v1198 = vshrl.u32 %v1197, 7
      %v1199 = vsub.s32 %v1196, %v1198
      %v1200 = vrot.slane %v1193, %v1199
      %v1201 = vcombine.low %v1055, %v1061
      %v1203 = vunpack.c.l.s4 1983009808
      %v1204 = vunpack.c.0.s8 %v1203
      %v1205 = vlaneseq
      %v1206 = vshrl.u32 %v1205, 7
      %v1207 = vsub.s32 %v1204, %v1206
      %v1208 = vrot.slane %v1201, %v1207
      %v1209 = vcombine.low %v945, %v1068
      %v1211 = vunpack.c.l.s4 1983009808
      %v1212 = vunpack.c.0.s8 %v1211
      %v1213 = vlaneseq
      %v1214 = vshrl.u32 %v1213, 7
      %v1215 = vsub.s32 %v1212, %v1214
      %v1216 = vrot.slane %v1209, %v1215
      %v1217 = vcombine.low %v1065, %v1071
      %v1219 = vunpack.c.l.s4 1983009808
      %v1220 = vunpack.c.0.s8 %v1219
      %v1221 = vlaneseq
      %v1222 = vshrl.u32 %v1221, 7
      %v1223 = vsub.s32 %v1220, %v1222
      %v1224 = vrot.slane %v1217, %v1223
      %v1225 = vcombine.low %v1200, %v1208
      %v1227 = vunpack.c.l.s4 1934713408
      %v1228 = vunpack.c.0.s8 %v1227
      %v1229 = vlaneseq
      %v1230 = vshrl.u32 %v1229, 7
      %v1231 = vsub.s32 %v1228, %v1230
      %v1232 = vrot.slane %v1225, %v1231
      %v1233 = vcombine.low %v1216, %v1224
      %v1235 = vunpack.c.l.s4 1934713408
      %v1236 = vunpack.c.0.s8 %v1235
      %v1237 = vlaneseq
      %v1238 = vshrl.u32 %v1237, 7
      %v1239 = vsub.s32 %v1236, %v1238
      %v1240 = vrot.slane %v1233, %v1239
      %v1241 = vcombine.low %v1232, %v1240
      %v1242 = vcombine.high %v1232, %v1240
      %v1243 = vcombine.low %v946, %v1078
      %v1245 = vunpack.c.l.s4 1983009808
      %v1246 = vunpack.c.0.s8 %v1245
      %v1247 = vlaneseq
      %v1248 = vshrl.u32 %v1247, 7
      %v1249 = vsub.s32 %v1246, %v1248
      %v1250 = vrot.slane %v1243, %v1249
      %v1251 = vcombine.low %v1075, %v1081
      %v1253 = vunpack.c.l.s4 1983009808
      %v1254 = vunpack.c.0.s8 %v1253
      %v1255 = vlaneseq
      %v1256 = vshrl.u32 %v1255, 7
      %v1257 = vsub.s32 %v1254, %v1256
      %v1258 = vrot.slane %v1251, %v1257
      %v1259 = vcombine.low %v947, %v1088
      %v1261 = vunpack.c.l.s4 1983009808
      %v1262 = vunpack.c.0.s8 %v1261
      %v1263 = vlaneseq
      %v1264 = vshrl.u32 %v1263, 7
      %v1265 = vsub.s32 %v1262, %v1264
      %v1266 = vrot.slane %v1259, %v1265
      %v1267 = vcombine.low %v1085, %v1091
      %v1269 = vunpack.c.l.s4 1983009808
      %v1270 = vunpack.c.0.s8 %v1269
      %v1271 = vlaneseq
      %v1272 = vshrl.u32 %v1271, 7
      %v1273 = vsub.s32 %v1270, %v1272
      %v1274 = vrot.slane %v1267, %v1273
      %v1275 = vcombine.low %v1250, %v1258
      %v1277 = vunpack.c.l.s4 1934713408
      %v1278 = vunpack.c.0.s8 %v1277
      %v1279 = vlaneseq
      %v1280 = vshrl.u32 %v1279, 7
      %v1281 = vsub.s32 %v1278, %v1280
      %v1282 = vrot.slane %v1275, %v1281
      %v1283 = vcombine.low %v1266, %v1274
      %v1285 = vunpack.c.l.s4 1934713408
      %v1286 = vunpack.c.0.s8 %v1285
      %v1287 = vlaneseq
      %v1288 = vshrl.u32 %v1287, 7
      %v1289 = vsub.s32 %v1286, %v1288
      %v1290 = vrot.slane %v1283, %v1289
      %v1291 = vcombine.low %v1282, %v1290
      %v1292 = vcombine.high %v1282, %v1290
      %v1293 = vsel %vm136, %v1141, -inf
      %1294 = vmax.xlane.f32.xlu0 %v1293
      %v1295 = vpop.xlane.xlu0 %1294
      %v1296 = vsel %vm136, %v1191, -inf
      %1297 = vmax.xlane.f32.xlu0 %v1296
      %v1298 = vpop.xlane.xlu0 %1297
      %v1299 = vsel %vm136, %v1241, -inf
      %1300 = vmax.xlane.f32.xlu0 %v1299
      %v1301 = vpop.xlane.xlu0 %1300
      %v1302 = vsel %vm136, %v1291, -inf
      %1303 = vmax.xlane.f32.xlu0 %v1302
      %v1304 = vpop.xlane.xlu0 %1303
      %v1305 = vsel %vm136, %v1142, -inf
      %1306 = vmax.xlane.f32.xlu0 %v1305
      %v1307 = vpop.xlane.xlu0 %1306
      %v1308 = vsel %vm136, %v1192, -inf
      %1309 = vmax.xlane.f32.xlu0 %v1308
      %v1310 = vpop.xlane.xlu0 %1309
      %v1311 = vsel %vm136, %v1242, -inf
      %1312 = vmax.xlane.f32.xlu0 %v1311
      %v1313 = vpop.xlane.xlu0 %1312
      %v1314 = vsel %vm136, %v1292, -inf
      %1315 = vmax.xlane.f32.xlu0 %v1314
      %v1316 = vpop.xlane.xlu0 %1315
      %v1317 = vsub.f32 %v1141, %v1295
      %v1318 = vsub.f32 %v1191, %v1298
      %v1319 = vsub.f32 %v1241, %v1301
      %v1320 = vsub.f32 %v1291, %v1304
      %v1321 = vsub.f32 %v1142, %v1307
      %v1322 = vsub.f32 %v1192, %v1310
      %v1323 = vsub.f32 %v1242, %v1313
      %v1324 = vsub.f32 %v1292, %v1316
      %v1325 = vmul.f32 %v1317, 1.442695
      %v1326 = vpow.pop %v1325
      %v1327 = vmul.f32 %v1318, 1.442695
      %v1328 = vpow.pop %v1327
      %v1329 = vmul.f32 %v1319, 1.442695
      %v1330 = vpow.pop %v1329
      %v1331 = vmul.f32 %v1320, 1.442695
      %v1332 = vpow.pop %v1331
      %v1333 = vmul.f32 %v1321, 1.442695
      %v1334 = vpow.pop %v1333
      %v1335 = vmul.f32 %v1322, 1.442695
      %v1336 = vpow.pop %v1335
      %v1337 = vmul.f32 %v1323, 1.442695
      %v1338 = vpow.pop %v1337
      %v1339 = vmul.f32 %v1324, 1.442695
      %v1340 = vpow.pop %v1339
      %v1341 = vsel %vm136, %v1326, 0.0
      %1342 = vadd.xlane.f32.xlu0 %v1341
      %v1343 = vpop.xlane.xlu0 %1342
      %v1344 = vsel %vm136, %v1328, 0.0
      %1345 = vadd.xlane.f32.xlu0 %v1344
      %v1346 = vpop.xlane.xlu0 %1345
      %v1347 = vsel %vm136, %v1330, 0.0
      %1348 = vadd.xlane.f32.xlu0 %v1347
      %v1349 = vpop.xlane.xlu0 %1348
      %v1350 = vsel %vm136, %v1332, 0.0
      %1351 = vadd.xlane.f32.xlu0 %v1350
      %v1352 = vpop.xlane.xlu0 %1351
      %v1353 = vsel %vm136, %v1334, 0.0
      %1354 = vadd.xlane.f32.xlu0 %v1353
      %v1355 = vpop.xlane.xlu0 %1354
      %v1356 = vsel %vm136, %v1336, 0.0
      %1357 = vadd.xlane.f32.xlu0 %v1356
      %v1358 = vpop.xlane.xlu0 %1357
      %v1359 = vsel %vm136, %v1338, 0.0
      %1360 = vadd.xlane.f32.xlu0 %v1359
      %v1361 = vpop.xlane.xlu0 %1360
      %v1362 = vsel %vm136, %v1340, 0.0
      %1363 = vadd.xlane.f32.xlu0 %v1362
      %v1364 = vpop.xlane.xlu0 %1363
      %v1365 = vrcp.pop %v1343
      %v1366 = vrcp.pop %v1346
      %v1367 = vrcp.pop %v1349
      %v1368 = vrcp.pop %v1352
      %v1369 = vrcp.pop %v1355
      %v1370 = vrcp.pop %v1358
      %v1371 = vrcp.pop %v1361
      %v1372 = vrcp.pop %v1364
      %v1373 = vmul.f32 %v1343, %v1365
      %v1374 = vmul.f32 %v1346, %v1366
      %v1375 = vmul.f32 %v1349, %v1367
      %v1376 = vmul.f32 %v1352, %v1368
      %v1377 = vmul.f32 %v1355, %v1369
      %v1378 = vmul.f32 %v1358, %v1370
      %v1379 = vmul.f32 %v1361, %v1371
      %v1380 = vmul.f32 %v1364, %v1372
      %v1381 = vsub.f32 2.0, %v1373
      %v1382 = vsub.f32 2.0, %v1374
      %v1383 = vsub.f32 2.0, %v1375
      %v1384 = vsub.f32 2.0, %v1376
      %v1385 = vsub.f32 2.0, %v1377
      %v1386 = vsub.f32 2.0, %v1378
      %v1387 = vsub.f32 2.0, %v1379
      %v1388 = vsub.f32 2.0, %v1380
      %v1389 = vmul.f32 %v1365, %v1381
      %v1390 = vmul.f32 %v1366, %v1382
      %v1391 = vmul.f32 %v1367, %v1383
      %v1392 = vmul.f32 %v1368, %v1384
      %v1393 = vmul.f32 %v1369, %v1385
      %v1394 = vmul.f32 %v1370, %v1386
      %v1395 = vmul.f32 %v1371, %v1387
      %v1396 = vmul.f32 %v1372, %v1388
      %v1397 = vmul.f32 %v1326, %v1389
      %v1398 = vmul.f32 %v1328, %v1390
      %v1399 = vmul.f32 %v1330, %v1391
      %v1400 = vmul.f32 %v1332, %v1392
      %v1401 = vmul.f32 %v1334, %v1393
      %v1402 = vmul.f32 %v1336, %v1394
      %v1403 = vmul.f32 %v1338, %v1395
      %v1404 = vmul.f32 %v1340, %v1396
      %v1405 = vand.u32 2147483647, %v948
      %v1406 = vsub.f32 0.0, %v1405
      %v1407 = vmul.f32 %v1406, 1.442695
      %v1408 = vpow.pop %v1407
      %v1409 = vadd.f32 %v1408, 1.0
      %v1410 = vrcp.pop %v1409
      %v1411 = vmul.f32 %v1409, %v1410
      %v1412 = vsub.f32 2.0, %v1411
      %v1413 = vmul.f32 %v1410, %v1412
      %vm1414 = vcmp.ge.f32.partialorder %v948, 0.0
      %v1415 = vsub.f32 1.0, %v1413
      %v1416 = vsel %vm1414, %v1413, %v1415
      %v1418 = vunpack.c.l.s4 1966171168
      %v1419 = vunpack.c.0.s8 %v1418
      %v1420 = vlaneseq
      %v1421 = vshrl.u32 %v1420, 7
      %v1422 = vsub.s32 %v1419, %v1421
      %v1423 = vrot.slane %v74, %v1422
      %v1424 = vcombine.high %v1423, %v1423
      %v1426 = vunpack.c.l.s4 1966171168
      %v1427 = vunpack.c.0.s8 %v1426
      %v1428 = vlaneseq
      %v1429 = vshrl.u32 %v1428, 7
      %v1430 = vsub.s32 %v1427, %v1429
      %v1431 = vrot.slane %v1423, %v1430
      %v1433 = vunpack.c.l.s4 1966171168
      %v1434 = vunpack.c.0.s8 %v1433
      %v1435 = vlaneseq
      %v1436 = vshrl.u32 %v1435, 7
      %v1437 = vsub.s32 %v1434, %v1436
      %v1438 = vrot.slane %v1424, %v1437
      %vm1439 = vcmask 31744
      %v1440 = vsel %vm1439, %v1431, 0
      %vm1442 = vcmask 1043456
      %v1444 = vsel %vm1442, %v1011, 0
      %1446 = vmatprep.subr.mxu0 0.0
      %1447 = vmatpush1.msra.mxu0 %v1444
      %1448 = vmatprep.subr.mxu0 0.0
      %1449 = vmatpush1.msra.mxu0 0.0
      %1450 = vmatprep.subr.mxu0 0.0
      %1451 = vmatpush1.msra.mxu0 0.0
      %1452 = vmatprep.subr.mxu0 0.0
      %1453 = vmatpush1.msra.mxu0 0.0
      %1454 = vmatprep.subr.mxu0 0.0
      %1455 = vmatpush1.msra.mxu0 0.0
      %1456 = vmatprep.subr.mxu0 0.0
      %1457 = vmatpush1.msra.mxu0 0.0
      %1458 = vmatprep.subr.mxu0 0.0
      %1459 = vmatpush1.msra.mxu0 0.0
      %1460 = vmatprep.subr.mxu0 0.0
      %1461 = vmatpush1.msra.mxu0 0.0
      %1462 = vmatprep.subr.mxu0 0.0
      %1463 = vmatpush1.msra.mxu0 0.0
      %1464 = vmatprep.subr.mxu0 0.0
      %1465 = vmatpush1.msra.mxu0 0.0
      %1466 = vmatprep.subr.mxu0 0.0
      %1467 = vmatpush1.msra.mxu0 0.0
      %1468 = vmatprep.subr.mxu0 0.0
      %1469 = vmatpush1.msra.mxu0 0.0
      %1470 = vmatprep.subr.mxu0 0.0
      %1471 = vmatpush1.msra.mxu0 0.0
      %1472 = vmatprep.subr.mxu0 0.0
      %1473 = vmatpush1.msra.mxu0 0.0
      %1474 = vmatprep.subr.mxu0 0.0
      %1475 = vmatpush1.msra.mxu0 0.0
      %1476 = vmatprep.subr.mxu0 0.0
      %1477 = vmatpush1.msra.mxu0 0.0
      %1478 = vmatprep.subr.mxu0 0.0
      %1479 = vmatpush1.msra.mxu0 0.0
      %1480 = vmatprep.subr.mxu0 0.0
      %1481 = vmatpush1.msra.mxu0 0.0
      %1482 = vmatprep.subr.mxu0 0.0
      %1483 = vmatpush1.msra.mxu0 0.0
      %1484 = vmatprep.subr.mxu0 0.0
      %1485 = vmatpush1.msra.mxu0 0.0
      %1486 = vmatprep.subr.mxu0 0.0
      %1487 = vmatpush1.msra.mxu0 0.0
      %1488 = vmatprep.subr.mxu0 0.0
      %1489 = vmatpush1.msra.mxu0 0.0
      %1490 = vmatprep.subr.mxu0 0.0
      %1491 = vmatpush1.msra.mxu0 0.0
      %1492 = vmatprep.subr.mxu0 0.0
      %1493 = vmatpush1.msra.mxu0 0.0
      %1494 = vmatprep.subr.mxu0 0.0
      %1495 = vmatpush1.msra.mxu0 0.0
      %1496 = vmatprep.subr.mxu0 0.0
      %1497 = vmatpush1.msra.mxu0 0.0
      %1498 = vmatprep.subr.mxu0 0.0
      %1499 = vmatpush1.msra.mxu0 0.0
      %1500 = vmatprep.subr.mxu0 0.0
      %1501 = vmatpush1.msra.mxu0 0.0
      %1502 = vmatprep.subr.mxu0 0.0
      %1503 = vmatpush1.msra.mxu0 0.0
      %1504 = vmatprep.subr.mxu0 0.0
      %1505 = vmatpush1.msra.mxu0 0.0
      %1506 = vmatprep.subr.mxu0 0.0
      %1507 = vmatpush1.msra.mxu0 0.0
      %1508 = vmatprep.subr.mxu0 0.0
      %1509 = vmatpush1.msra.mxu0 0.0
      %1510 = vmatprep.mubr.f32.mxu0 0.0
      %1511 = vmatmul.mubr.f32.gmra.mrb[0].mxu0 %v1440
      %v1512 = vpop.f32.mrb[0].mxu0
      %v1513 = vadd.f32 0.0, %v1512
      %v1514 = vpop.f32.mrb[0].mxu0
      %1515 = vdwg.mxu0
      %v1516 = vsel %vm1439, %v1438, 0
      %v1519 = vsel %vm1442, %v1012, 0
      %1521 = vmatprep.subr.mxu0 0.0
      %1522 = vmatpush1.msra.mxu0 %v1519
      %1523 = vmatprep.subr.mxu0 0.0
      %1524 = vmatpush1.msra.mxu0 0.0
      %1525 = vmatprep.subr.mxu0 0.0
      %1526 = vmatpush1.msra.mxu0 0.0
      %1527 = vmatprep.subr.mxu0 0.0
      %1528 = vmatpush1.msra.mxu0 0.0
      %1529 = vmatprep.subr.mxu0 0.0
      %1530 = vmatpush1.msra.mxu0 0.0
      %1531 = vmatprep.subr.mxu0 0.0
      %1532 = vmatpush1.msra.mxu0 0.0
      %1533 = vmatprep.subr.mxu0 0.0
      %1534 = vmatpush1.msra.mxu0 0.0
      %1535 = vmatprep.subr.mxu0 0.0
      %1536 = vmatpush1.msra.mxu0 0.0
      %1537 = vmatprep.subr.mxu0 0.0
      %1538 = vmatpush1.msra.mxu0 0.0
      %1539 = vmatprep.subr.mxu0 0.0
      %1540 = vmatpush1.msra.mxu0 0.0
      %1541 = vmatprep.subr.mxu0 0.0
      %1542 = vmatpush1.msra.mxu0 0.0
      %1543 = vmatprep.subr.mxu0 0.0
      %1544 = vmatpush1.msra.mxu0 0.0
      %1545 = vmatprep.subr.mxu0 0.0
      %1546 = vmatpush1.msra.mxu0 0.0
      %1547 = vmatprep.subr.mxu0 0.0
      %1548 = vmatpush1.msra.mxu0 0.0
      %1549 = vmatprep.subr.mxu0 0.0
      %1550 = vmatpush1.msra.mxu0 0.0
      %1551 = vmatprep.subr.mxu0 0.0
      %1552 = vmatpush1.msra.mxu0 0.0
      %1553 = vmatprep.subr.mxu0 0.0
      %1554 = vmatpush1.msra.mxu0 0.0
      %1555 = vmatprep.subr.mxu0 0.0
      %1556 = vmatpush1.msra.mxu0 0.0
      %1557 = vmatprep.subr.mxu0 0.0
      %1558 = vmatpush1.msra.mxu0 0.0
      %1559 = vmatprep.subr.mxu0 0.0
      %1560 = vmatpush1.msra.mxu0 0.0
      %1561 = vmatprep.subr.mxu0 0.0
      %1562 = vmatpush1.msra.mxu0 0.0
      %1563 = vmatprep.subr.mxu0 0.0
      %1564 = vmatpush1.msra.mxu0 0.0
      %1565 = vmatprep.subr.mxu0 0.0
      %1566 = vmatpush1.msra.mxu0 0.0
      %1567 = vmatprep.subr.mxu0 0.0
      %1568 = vmatpush1.msra.mxu0 0.0
      %1569 = vmatprep.subr.mxu0 0.0
      %1570 = vmatpush1.msra.mxu0 0.0
      %1571 = vmatprep.subr.mxu0 0.0
      %1572 = vmatpush1.msra.mxu0 0.0
      %1573 = vmatprep.subr.mxu0 0.0
      %1574 = vmatpush1.msra.mxu0 0.0
      %1575 = vmatprep.subr.mxu0 0.0
      %1576 = vmatpush1.msra.mxu0 0.0
      %1577 = vmatprep.subr.mxu0 0.0
      %1578 = vmatpush1.msra.mxu0 0.0
      %1579 = vmatprep.subr.mxu0 0.0
      %1580 = vmatpush1.msra.mxu0 0.0
      %1581 = vmatprep.subr.mxu0 0.0
      %1582 = vmatpush1.msra.mxu0 0.0
      %1583 = vmatprep.subr.mxu0 0.0
      %1584 = vmatpush1.msra.mxu0 0.0
      %1585 = vmatprep.mubr.f32.mxu0 0.0
      %1586 = vmatmul.mubr.f32.gmra.mrb[0].mxu0 %v1516
      %v1587 = vpop.f32.mrb[0].mxu0
      %v1588 = vadd.f32 0.0, %v1587
      %v1589 = vpop.f32.mrb[0].mxu0
      %1590 = vdwg.mxu0
      %v1593 = vunpack.c.l.s4 1966171168
      %v1594 = vunpack.c.0.s8 %v1593
      %v1595 = vlaneseq
      %v1596 = vshrl.u32 %v1595, 7
      %v1597 = vsub.s32 %v1594, %v1596
      %v1598 = vrot.slane %v75, %v1597
      %v1599 = vcombine.high %v1598, %v1598
      %v1601 = vunpack.c.l.s4 1966171168
      %v1602 = vunpack.c.0.s8 %v1601
      %v1603 = vlaneseq
      %v1604 = vshrl.u32 %v1603, 7
      %v1605 = vsub.s32 %v1602, %v1604
      %v1606 = vrot.slane %v1598, %v1605
      %v1608 = vunpack.c.l.s4 1966171168
      %v1609 = vunpack.c.0.s8 %v1608
      %v1610 = vlaneseq
      %v1611 = vshrl.u32 %v1610, 7
      %v1612 = vsub.s32 %v1609, %v1611
      %v1613 = vrot.slane %v1599, %v1612
      %v1614 = vsel %vm136, %v1606, 0
      %1616 = vmatprep.subr.mxu0 0.0
      %1617 = vmatpush1.msra.mxu0 %v1397
      %1618 = vmatprep.subr.mxu0 0.0
      %1619 = vmatpush1.msra.mxu0 %v1398
      %1620 = vmatprep.subr.mxu0 0.0
      %1621 = vmatpush1.msra.mxu0 %v1399
      %1622 = vmatprep.subr.mxu0 0.0
      %1623 = vmatpush1.msra.mxu0 %v1400
      %1624 = vmatprep.subr.mxu0 0.0
      %1625 = vmatpush1.msra.mxu0 0.0
      %1626 = vmatprep.subr.mxu0 0.0
      %1627 = vmatpush1.msra.mxu0 0.0
      %1628 = vmatprep.subr.mxu0 0.0
      %1629 = vmatpush1.msra.mxu0 0.0
      %1630 = vmatprep.subr.mxu0 0.0
      %1631 = vmatpush1.msra.mxu0 0.0
      %1632 = vmatprep.subr.mxu0 0.0
      %1633 = vmatpush1.msra.mxu0 0.0
      %1634 = vmatprep.subr.mxu0 0.0
      %1635 = vmatpush1.msra.mxu0 0.0
      %1636 = vmatprep.subr.mxu0 0.0
      %1637 = vmatpush1.msra.mxu0 0.0
      %1638 = vmatprep.subr.mxu0 0.0
      %1639 = vmatpush1.msra.mxu0 0.0
      %1640 = vmatprep.subr.mxu0 0.0
      %1641 = vmatpush1.msra.mxu0 0.0
      %1642 = vmatprep.subr.mxu0 0.0
      %1643 = vmatpush1.msra.mxu0 0.0
      %1644 = vmatprep.subr.mxu0 0.0
      %1645 = vmatpush1.msra.mxu0 0.0
      %1646 = vmatprep.subr.mxu0 0.0
      %1647 = vmatpush1.msra.mxu0 0.0
      %1648 = vmatprep.subr.mxu0 0.0
      %1649 = vmatpush1.msra.mxu0 0.0
      %1650 = vmatprep.subr.mxu0 0.0
      %1651 = vmatpush1.msra.mxu0 0.0
      %1652 = vmatprep.subr.mxu0 0.0
      %1653 = vmatpush1.msra.mxu0 0.0
      %1654 = vmatprep.subr.mxu0 0.0
      %1655 = vmatpush1.msra.mxu0 0.0
      %1656 = vmatprep.subr.mxu0 0.0
      %1657 = vmatpush1.msra.mxu0 0.0
      %1658 = vmatprep.subr.mxu0 0.0
      %1659 = vmatpush1.msra.mxu0 0.0
      %1660 = vmatprep.subr.mxu0 0.0
      %1661 = vmatpush1.msra.mxu0 0.0
      %1662 = vmatprep.subr.mxu0 0.0
      %1663 = vmatpush1.msra.mxu0 0.0
      %1664 = vmatprep.subr.mxu0 0.0
      %1665 = vmatpush1.msra.mxu0 0.0
      %1666 = vmatprep.subr.mxu0 0.0
      %1667 = vmatpush1.msra.mxu0 0.0
      %1668 = vmatprep.subr.mxu0 0.0
      %1669 = vmatpush1.msra.mxu0 0.0
      %1670 = vmatprep.subr.mxu0 0.0
      %1671 = vmatpush1.msra.mxu0 0.0
      %1672 = vmatprep.subr.mxu0 0.0
      %1673 = vmatpush1.msra.mxu0 0.0
      %1674 = vmatprep.subr.mxu0 0.0
      %1675 = vmatpush1.msra.mxu0 0.0
      %1676 = vmatprep.subr.mxu0 0.0
      %1677 = vmatpush1.msra.mxu0 0.0
      %1678 = vmatprep.subr.mxu0 0.0
      %1679 = vmatpush1.msra.mxu0 0.0
      %1680 = vmatprep.mubr.f32.mxu0 0.0
      %1681 = vmatmul.mubr.f32.gmra.mrb[0].mxu0 %v1614
      %v1682 = vpop.f32.mrb[0].mxu0
      %v1683 = vadd.f32 0.0, %v1682
      %v1684 = vpop.f32.mrb[0].mxu0
      %1685 = vdwg.mxu0
      %v1686 = vsel %vm136, %v1613, 0
      %1688 = vmatprep.subr.mxu0 0.0
      %1689 = vmatpush1.msra.mxu0 %v1401
      %1690 = vmatprep.subr.mxu0 0.0
      %1691 = vmatpush1.msra.mxu0 %v1402
      %1692 = vmatprep.subr.mxu0 0.0
      %1693 = vmatpush1.msra.mxu0 %v1403
      %1694 = vmatprep.subr.mxu0 0.0
      %1695 = vmatpush1.msra.mxu0 %v1404
      %1696 = vmatprep.subr.mxu0 0.0
      %1697 = vmatpush1.msra.mxu0 0.0
      %1698 = vmatprep.subr.mxu0 0.0
      %1699 = vmatpush1.msra.mxu0 0.0
      %1700 = vmatprep.subr.mxu0 0.0
      %1701 = vmatpush1.msra.mxu0 0.0
      %1702 = vmatprep.subr.mxu0 0.0
      %1703 = vmatpush1.msra.mxu0 0.0
      %1704 = vmatprep.subr.mxu0 0.0
      %1705 = vmatpush1.msra.mxu0 0.0
      %1706 = vmatprep.subr.mxu0 0.0
      %1707 = vmatpush1.msra.mxu0 0.0
      %1708 = vmatprep.subr.mxu0 0.0
      %1709 = vmatpush1.msra.mxu0 0.0
      %1710 = vmatprep.subr.mxu0 0.0
      %1711 = vmatpush1.msra.mxu0 0.0
      %1712 = vmatprep.subr.mxu0 0.0
      %1713 = vmatpush1.msra.mxu0 0.0
      %1714 = vmatprep.subr.mxu0 0.0
      %1715 = vmatpush1.msra.mxu0 0.0
      %1716 = vmatprep.subr.mxu0 0.0
      %1717 = vmatpush1.msra.mxu0 0.0
      %1718 = vmatprep.subr.mxu0 0.0
      %1719 = vmatpush1.msra.mxu0 0.0
      %1720 = vmatprep.subr.mxu0 0.0
      %1721 = vmatpush1.msra.mxu0 0.0
      %1722 = vmatprep.subr.mxu0 0.0
      %1723 = vmatpush1.msra.mxu0 0.0
      %1724 = vmatprep.subr.mxu0 0.0
      %1725 = vmatpush1.msra.mxu0 0.0
      %1726 = vmatprep.subr.mxu0 0.0
      %1727 = vmatpush1.msra.mxu0 0.0
      %1728 = vmatprep.subr.mxu0 0.0
      %1729 = vmatpush1.msra.mxu0 0.0
      %1730 = vmatprep.subr.mxu0 0.0
      %1731 = vmatpush1.msra.mxu0 0.0
      %1732 = vmatprep.subr.mxu0 0.0
      %1733 = vmatpush1.msra.mxu0 0.0
      %1734 = vmatprep.subr.mxu0 0.0
      %1735 = vmatpush1.msra.mxu0 0.0
      %1736 = vmatprep.subr.mxu0 0.0
      %1737 = vmatpush1.msra.mxu0 0.0
      %1738 = vmatprep.subr.mxu0 0.0
      %1739 = vmatpush1.msra.mxu0 0.0
      %1740 = vmatprep.subr.mxu0 0.0
      %1741 = vmatpush1.msra.mxu0 0.0
      %1742 = vmatprep.subr.mxu0 0.0
      %1743 = vmatpush1.msra.mxu0 0.0
      %1744 = vmatprep.subr.mxu0 0.0
      %1745 = vmatpush1.msra.mxu0 0.0
      %1746 = vmatprep.subr.mxu0 0.0
      %1747 = vmatpush1.msra.mxu0 0.0
      %1748 = vmatprep.subr.mxu0 0.0
      %1749 = vmatpush1.msra.mxu0 0.0
      %1750 = vmatprep.subr.mxu0 0.0
      %1751 = vmatpush1.msra.mxu0 0.0
      %1752 = vmatprep.mubr.f32.mxu0 0.0
      %1753 = vmatmul.mubr.f32.gmra.mrb[0].mxu0 %v1686
      %v1754 = vpop.f32.mrb[0].mxu0
      %v1755 = vadd.f32 0.0, %v1754
      %v1756 = vpop.f32.mrb[0].mxu0
      %1757 = vdwg.mxu0
      %v1758 = vadd.f32 %v1513, %v1683
      %v1759 = vadd.f32 %v1588, %v1755
      %v1762 = vrot.slane %v1759, 7
      %vm1763 = vcmask 1041409
      %v1764 = vsel %vm1763, %v1762, %v1758
      %v1766 = vmul.f32 %v1416, %v1764
      %v1767 = vsub.f32 1.0, %v1416
      %v1768 = vmul.f32 %v1767, %v1764
      %1769 = vst.msk [vmem:[#allocation2] sm:$0x3] %vm76, %v1768
      %v1770 = vld [vmem:[%s5] sm:$0xff]
      %v1771 = vld [vmem:[%s5 + $0x8] sm:$0xff]
      %v1772 = vld [vmem:[%s5 + $0x10] sm:$0xff]
      %v1773 = vld [vmem:[%s5 + $0x18] sm:$0xff]
      %v1774 = vld [vmem:[%s6] sm:$0x1]
      %v1776 = vlaneseq
      %v1777 = vshrl.u32 %v1776, 7
      %v1778 = vsub.s32 0, %v1777
      %v1779 = vrot.slane %v1774, %v1778
      %v1782 = vsel %vm136, %v1766, 0
      %1784 = vmatprep.subr.mxu0 0.0
      %1785 = vmatpush1.msra.mxu0 %v1770
      %1786 = vmatprep.subr.mxu0 0.0
      %1787 = vmatpush1.msra.mxu0 %v1771
      %1788 = vmatprep.subr.mxu0 0.0
      %1789 = vmatpush1.msra.mxu0 %v1772
      %1790 = vmatprep.subr.mxu0 0.0
      %1791 = vmatpush1.msra.mxu0 %v1773
      %1792 = vmatprep.subr.mxu0 0.0
      %1793 = vmatpush1.msra.mxu0 0.0
      %1794 = vmatprep.subr.mxu0 0.0
      %1795 = vmatpush1.msra.mxu0 0.0
      %1796 = vmatprep.subr.mxu0 0.0
      %1797 = vmatpush1.msra.mxu0 0.0
      %1798 = vmatprep.subr.mxu0 0.0
      %1799 = vmatpush1.msra.mxu0 0.0
      %1800 = vmatprep.subr.mxu0 0.0
      %1801 = vmatpush1.msra.mxu0 0.0
      %1802 = vmatprep.subr.mxu0 0.0
      %1803 = vmatpush1.msra.mxu0 0.0
      %1804 = vmatprep.subr.mxu0 0.0
      %1805 = vmatpush1.msra.mxu0 0.0
      %1806 = vmatprep.subr.mxu0 0.0
      %1807 = vmatpush1.msra.mxu0 0.0
      %1808 = vmatprep.subr.mxu0 0.0
      %1809 = vmatpush1.msra.mxu0 0.0
      %1810 = vmatprep.subr.mxu0 0.0
      %1811 = vmatpush1.msra.mxu0 0.0
      %1812 = vmatprep.subr.mxu0 0.0
      %1813 = vmatpush1.msra.mxu0 0.0
      %1814 = vmatprep.subr.mxu0 0.0
      %1815 = vmatpush1.msra.mxu0 0.0
      %1816 = vmatprep.subr.mxu0 0.0
      %1817 = vmatpush1.msra.mxu0 0.0
      %1818 = vmatprep.subr.mxu0 0.0
      %1819 = vmatpush1.msra.mxu0 0.0
      %1820 = vmatprep.subr.mxu0 0.0
      %1821 = vmatpush1.msra.mxu0 0.0
      %1822 = vmatprep.subr.mxu0 0.0
      %1823 = vmatpush1.msra.mxu0 0.0
      %1824 = vmatprep.subr.mxu0 0.0
      %1825 = vmatpush1.msra.mxu0 0.0
      %1826 = vmatprep.subr.mxu0 0.0
      %1827 = vmatpush1.msra.mxu0 0.0
      %1828 = vmatprep.subr.mxu0 0.0
      %1829 = vmatpush1.msra.mxu0 0.0
      %1830 = vmatprep.subr.mxu0 0.0
      %1831 = vmatpush1.msra.mxu0 0.0
      %1832 = vmatprep.subr.mxu0 0.0
      %1833 = vmatpush1.msra.mxu0 0.0
      %1834 = vmatprep.subr.mxu0 0.0
      %1835 = vmatpush1.msra.mxu0 0.0
      %1836 = vmatprep.subr.mxu0 0.0
      %1837 = vmatpush1.msra.mxu0 0.0
      %1838 = vmatprep.subr.mxu0 0.0
      %1839 = vmatpush1.msra.mxu0 0.0
      %1840 = vmatprep.subr.mxu0 0.0
      %1841 = vmatpush1.msra.mxu0 0.0
      %1842 = vmatprep.subr.mxu0 0.0
      %1843 = vmatpush1.msra.mxu0 0.0
      %1844 = vmatprep.subr.mxu0 0.0
      %1845 = vmatpush1.msra.mxu0 0.0
      %1846 = vmatprep.subr.mxu0 0.0
      %1847 = vmatpush1.msra.mxu0 0.0
      %1848 = vmatprep.mubr.f32.mxu0 0.0
      %1849 = vmatmul.mubr.f32.gmra.mrb[0].mxu0 %v1782
      %v1850 = vpop.f32.mrb[0].mxu0
      %v1851 = vadd.f32 %v1779, %v1850
      %v1852 = vpop.f32.mrb[0].mxu0
      %1853 = vdwg.mxu0
      %s1854 = scalar_lea.vmem [#allocation8], %s72
      %1855 = vst.msk [vmem:[%s1854] sm:$0x3] %vm76, %v1768
      %1857 = vrot.lane.b32.xlu0 %v1851, 32
      %v1858 = vpop.permute.xlu0 %1857
      %vm1860 = vcmask 271616
      %1861 = vst.msk [vmem:[%s1854] sm:$0x3] %vm1860, %v1858
    $region46: #{tpu_custom_call.1} parent=1 // loop_footer
      %s71 = sadd.s32 1, %s67
    $region47: #{tpu_custom_call.1} parent=1 // loop_footer_branch
      %66 = sbr.rel target = $region43
    $region48: #{tpu_custom_call.1} parent=1 // loop_exit
      _
    // Predicated region
    $region49: #{tpu_custom_call.1} parent=1 // pred_check
      _
    $region50: #{tpu_custom_call.1} parent=1 // pred_check_branch
      %1863 = sbr.rel (0) target = $region52
    $region51: #{tpu_custom_call.1} parent=1 // pred_region
      %s1865 = ssub.s32 256, 256
      %1866 = vsyncadd [#allocation5], %s1865
      %s1867 = sshll.u32 [#allocation8], 4
      %s1868 = int_to_ptr.vmem [resolvable:$true] %s1867
      %1873 = dma.vmem_to_hbm [thread:$0]  %s1868, 256, %s7, [#allocation5], 32, 32, 2
    $region52: #{tpu_custom_call.1} parent=1 // pred_fallthru
      _
    // Predicated region
    $region53: #{tpu_custom_call.1} parent=1 // pred_check
      _
    $region54: #{tpu_custom_call.1} parent=1 // pred_check_branch
      %1875 = sbr.rel (0) target = $region56
    $region55: #{tpu_custom_call.1} parent=1 // pred_region
      %1876 = dma.done [#allocation5], 256
    $region56: #{tpu_custom_call.1} parent=1 // pred_fallthru
      _
    %1877 = vsyncpa [#allocation4], 1
    %1878 = vsyncpa [#allocation7], 1
    %1879 = vsyncpa [#allocation5], 1

</llo_original>
